<compile_context>
chip_gen: v7x
topology: tpu7x:2x2x1
jax: 0.10.0
libtpu: 0.0.40
codegen_flags: <defaults>
</compile_context>

<pallas_src>
import functools

import jax
import jax.numpy as jnp
from jax.experimental import pallas as pl
from jax.experimental.pallas import tpu as pltpu


# -----------------------------------------------------------------------------
# Fused encoder kernel: coord-channel generation + all pointwise matmuls.
# Layout: channels-first, pixels on the lane axis.
#   x_ref   : (1, Cin,  tile_n)  bf16   pooled + height-flipped RGB pixels
#   weights : channels-first (Cout, Cin) tiles, VMEM-resident
#   o_ref   : (1, 96,   tile_n)  bf16   triplane features (final row order)
# -----------------------------------------------------------------------------
def _fused_encoder_kernel(
    x_ref,
    we_rgb_ref, we_coord_ref, be_ref,    # merged low|high encoder stand-in
    wv_ref, bv_ref,                      # low-reso ViT stand-in
    wtl_ref, wth_ref, bt_ref,            # triplane predictor stand-in (split)
    o_ref,
    *, w_ds, h_ds, inv_h, rows_per_tile,
):
    tile_n = x_ref.shape[-1]
    hidden = wv_ref.shape[0]

    # ---- coordinate channels, generated in-kernel at downsampled resolution.
    # (2r+0.5)/H and (2c+0.5)/H == 2x2 average pooling of the full-resolution
    # i/H, j/H channels built by the reference forward() (both divided by H,
    # matching the reference).  Tiles cover whole pixel rows, so only small
    # LOCAL indices (p < tile_n <= 8192) go through the float-floor trick,
    # which is exact in f32 at that range.
    p = jax.lax.broadcasted_iota(jnp.int32, (1, tile_n), 1).astype(jnp.float32)
    r_loc = jnp.floor((p + 0.5) * (1.0 / w_ds))          # local row (exact)
    c = p - r_loc * w_ds                                 # column (exact)
    row0 = (pl.program_id(1) * rows_per_tile).astype(jnp.float32)
    r_out = r_loc + row0                                 # output row index
    # Height flip (common to all three planes) is folded into the input, so
    # the coordinate for output row r corresponds to ORIGINAL row h-1-r.
    row_coord = (2.0 * (h_ds - 1.0 - r_out) + 0.5) * inv_h
    col_coord = (2.0 * c + 0.5) * inv_h

    rgb = x_ref[0]                                       # (Cin, tile_n) bf16

    # ---- merged low+high encoder stand-in:
    # RGB columns on the MXU in bf16; the two coordinate columns as f32
    # rank-1 VPU updates (precision kept, no f32 MXU slow path, no sublane
    # concat relayout).
    wc = we_coord_ref[...]                               # (2H, 2) f32
    y = jnp.dot(we_rgb_ref[...], rgb, preferred_element_type=jnp.float32)
    y = y + wc[:, 0:1] * row_coord + wc[:, 1:2] * col_coord + be_ref[...]
    y = jnp.maximum(y, 0.0)
    fl = y[:hidden]                                      # low-reso features
    fh = y[hidden:]                                      # high-reso features

    # ---- low-reso ViT stand-in
    flv = jnp.dot(wv_ref[...], fl.astype(jnp.bfloat16),
                  preferred_element_type=jnp.float32)
    flv = jnp.maximum(flv + bv_ref[...], 0.0)

    # ---- triplane predictor stand-in: split-weight dots (no (N, 2H) concat)
    planes = (
        jnp.dot(wtl_ref[...], flv.astype(jnp.bfloat16),
                preferred_element_type=jnp.float32)
        + jnp.dot(wth_ref[...], fh.astype(jnp.bfloat16),
                  preferred_element_type=jnp.float32)
        + bt_ref[...]
    )
    o_ref[0] = planes.astype(o_ref.dtype)                # bf16 store


# -----------------------------------------------------------------------------
# Parameters (channels-first orientation: (Cout, Cin), biases (Cout, 1)).
# -----------------------------------------------------------------------------
def init_params(key, in_ch, hidden, out_channels):
    k = jax.random.split(key, 9)
    s = 0.1
    return {
        "w_low": s * jax.random.normal(k[0], (hidden, in_ch), jnp.float32),
        "b_low": s * jax.random.normal(k[1], (hidden, 1), jnp.float32),
        "w_vit": s * jax.random.normal(k[2], (hidden, hidden), jnp.float32),
        "b_vit": s * jax.random.normal(k[3], (hidden, 1), jnp.float32),
        "w_high": s * jax.random.normal(k[4], (hidden, in_ch), jnp.float32),
        "b_high": s * jax.random.normal(k[5], (hidden, 1), jnp.float32),
        "w_tri_low": s * jax.random.normal(k[6], (out_channels, hidden), jnp.float32),
        "w_tri_high": s * jax.random.normal(k[7], (out_channels, hidden), jnp.float32),
        "b_tri": s * jax.random.normal(k[8], (out_channels, 1), jnp.float32),
    }


# -----------------------------------------------------------------------------
# Public forward: (B, 3, H, W) -> (B, 3, out_channels//3, H//2, W//2)  [bf16]
# -----------------------------------------------------------------------------
def img2plane_forward(x_nchw, params, out_channels=96, tile_n_target=4096):
    B, Cin, H, W = x_nchw.shape
    h, w = H // 2, W // 2
    npix = h * w
    plane_c = out_channels // 3
    hidden = params["w_vit"].shape[0]

    # 2x2 average pool on the raw channels-first input + height flip (fused by
    # XLA into one cheap pass over the small 3-channel input).  The coordinate
    # channels are generated inside the fused kernel.
    x = x_nchw.astype(jnp.float32)
    x_ds = x.reshape(B, Cin, h, 2, w, 2).mean(axis=(3, 5))      # (B, Cin, h, w)
    x_ds = jnp.flip(x_ds, axis=2)                               # fold h-flip
    x_flat = x_ds.reshape(B, Cin, npix).astype(jnp.bfloat16)    # pixels on lanes

    # Merged low|high encoder weights; RGB columns bf16, coord columns f32.
    w_enc = jnp.concatenate([params["w_low"], params["w_high"]], axis=0)
    we_rgb = w_enc[:, :Cin].astype(jnp.bfloat16)                # (2H, Cin)
    we_coord = w_enc[:, Cin:Cin + 2].astype(jnp.float32)        # (2H, 2)
    b_enc = jnp.concatenate([params["b_low"], params["b_high"]],
                            axis=0).astype(jnp.float32)         # (2H, 1)

    # Row-aligned, lane-dense pixel tiles.
    rows_per_tile = min(h, max(1, tile_n_target // w))
    tile_n = rows_per_tile * w
    if tile_n != npix and tile_n % 128 != 0:
        # Keep the output store lane-dense; fall back to a single full tile.
        rows_per_tile, tile_n = h, npix
    n_tiles = pl.cdiv(h, rows_per_tile)

    # Explicit VMEM budget (double-buffered IO + f32 intermediates + weights),
    # capped at 64 MiB so the same tiling is safe on v7x's smaller VMEM.
    f32b, bf16b = 4, 2
    weight_bytes = (2 * hidden * Cin * bf16b + 2 * hidden * 2 * f32b
                    + 2 * hidden * f32b + hidden * hidden * bf16b
                    + hidden * f32b + 2 * out_channels * hidden * bf16b
                    + out_channels * f32b)
    live_bytes = (3 * hidden + out_channels + 4) * tile_n * f32b
    io_bytes = 2 * (Cin + out_channels) * tile_n * bf16b
    vmem_limit = int(min(64 << 20,
                         max(32 << 20,
                             2 * weight_bytes + live_bytes + io_bytes + (4 << 20))))

    const = lambda b, i: (0, 0)
    kernel = functools.partial(_fused_encoder_kernel,
                               w_ds=float(w), h_ds=float(h), inv_h=1.0 / H,
                               rows_per_tile=rows_per_tile)

    planes_flat = pl.pallas_call(
        kernel,
        out_shape=jax.ShapeDtypeStruct((B, out_channels, npix), jnp.bfloat16),
        grid_spec=pltpu.PrefetchScalarGridSpec(
            num_scalar_prefetch=0,
            grid=(B, n_tiles),
            in_specs=[
                pl.BlockSpec((1, Cin, tile_n), lambda b, i: (b, 0, i)),
                pl.BlockSpec((2 * hidden, Cin), const),
                pl.BlockSpec((2 * hidden, 2), const),
                pl.BlockSpec((2 * hidden, 1), const),
                pl.BlockSpec((hidden, hidden), const),
                pl.BlockSpec((hidden, 1), const),
                pl.BlockSpec((out_channels, hidden), const),
                pl.BlockSpec((out_channels, hidden), const),
                pl.BlockSpec((out_channels, 1), const),
            ],
            out_specs=pl.BlockSpec((1, out_channels, tile_n),
                                   lambda b, i: (b, 0, i)),
        ),
        compiler_params=pltpu.CompilerParams(
            dimension_semantics=("parallel", "parallel"),
            vmem_limit_bytes=vmem_limit),
    )(
        x_flat,
        we_rgb, we_coord, b_enc,
        params["w_vit"].astype(jnp.bfloat16), params["b_vit"].astype(jnp.float32),
        params["w_tri_low"].astype(jnp.bfloat16),
        params["w_tri_high"].astype(jnp.bfloat16),
        params["b_tri"].astype(jnp.float32),
    )

    # Channels-first output is already NCHW with the height flip applied:
    # (B, 96, h*w) -> (B, 3, 32, h, w) is a free view.  Only the zy plane still
    # needs its width flip (torch.flip(..., [2, 3]) = h-flip + w-flip).
    planes = planes_flat.reshape(B, 3, plane_c, h, w)
    return planes.at[:, 2].set(jnp.flip(planes[:, 2], axis=-1))


# -----------------------------------------------------------------------------
# Pure-JAX reference of the stand-in forward (matches original flip semantics)
# for numerical validation of the fused kernel path.
# -----------------------------------------------------------------------------
def _reference_forward(x_nchw, params, out_channels=96):
    B, Cin, H, W = x_nchw.shape
    h, w = H // 2, W // 2
    x = x_nchw.astype(jnp.float32)
    x_ds = x.reshape(B, Cin, h, 2, w, 2).mean(axis=(3, 5))
    rr = (2.0 * jnp.arange(h) + 0.5) / H
    cc = (2.0 * jnp.arange(w) + 0.5) / H
    row = jnp.broadcast_to(rr[:, None], (h, w))
    col = jnp.broadcast_to(cc[None, :], (h, w))
    coords = jnp.broadcast_to(jnp.stack([row, col])[None], (B, 2, h, w))
    x5 = jnp.concatenate([x_ds, coords], axis=1).reshape(B, Cin + 2, h * w)
    relu = lambda t: jnp.maximum(t, 0.0)
    fl = relu(jnp.einsum("ok,bkn->bon", params["w_low"], x5) + params["b_low"][None])
    flv = relu(jnp.einsum("ok,bkn->bon", params["w_vit"], fl) + params["b_vit"][None])
    fh = relu(jnp.einsum("ok,bkn->bon", params["w_high"], x5) + params["b_high"][None])
    out = (jnp.einsum("ok,bkn->bon", params["w_tri_low"], flv)
           + jnp.einsum("ok,bkn->bon", params["w_tri_high"], fh)
           + params["b_tri"][None])
    planes = out.reshape(B, 3, out_channels // 3, h, w)
    planes_xy = jnp.flip(planes[:, 0], axis=2)
    planes_xz = jnp.flip(planes[:, 1], axis=2)
    planes_zy = jnp.flip(planes[:, 2], axis=(2, 3))
    return jnp.stack([planes_xy, planes_xz, planes_zy], axis=1)


if __name__ == "__main__":
    B, C, H, W = 2, 3, 16, 16        # small analog of (B, 3, 512, 512)
    hidden = 32
    out_channels = 96

    key = jax.random.PRNGKey(0)
    kx, kp = jax.random.split(key)
    x = jax.random.normal(kx, (B, C, H, W), jnp.float32)
    params = init_params(kp, in_ch=C + 2, hidden=hidden, out_channels=out_channels)

    fwd = jax.jit(functools.partial(img2plane_forward, out_channels=out_channels))
    planes = jax.block_until_ready(fwd(x, params))

    expected = (B, 3, out_channels // 3, H // 2, W // 2)
    assert planes.shape == expected, (planes.shape, expected)
    assert planes.dtype == jnp.bfloat16, planes.dtype
    assert bool(jnp.all(jnp.isfinite(planes)))

    ref = _reference_forward(x, params, out_channels=out_channels)
    err = float(jnp.max(jnp.abs(planes.astype(jnp.float32) - ref)))
    assert err < 0.1, err
    print("KERNEL_OK")
</pallas_src>

<mosaic_0001>
module attributes {stable_mosaic.version = 11 : i64} {
  func.func @_fused_encoder_kernel(%arg0: i32, %arg1: i32, %arg2: memref<1x3x64xbf16, #tpu.memory_space<vmem>>, %arg3: memref<64x3xbf16, #tpu.memory_space<vmem>>, %arg4: memref<64x2xf32, #tpu.memory_space<vmem>>, %arg5: memref<64x1xf32, #tpu.memory_space<vmem>>, %arg6: memref<32x32xbf16, #tpu.memory_space<vmem>>, %arg7: memref<32x1xf32, #tpu.memory_space<vmem>>, %arg8: memref<96x32xbf16, #tpu.memory_space<vmem>>, %arg9: memref<96x32xbf16, #tpu.memory_space<vmem>>, %arg10: memref<96x1xf32, #tpu.memory_space<vmem>>, %arg11: memref<1x96x64xbf16, #tpu.memory_space<vmem>>) attributes {dimension_semantics = [#tpu.dimension_semantics<parallel>, #tpu.dimension_semantics<parallel>], iteration_bounds = array<i64: 2, 1>, scalar_prefetch = 0 : i64, scratch_operands = 0 : i64, tpu.core_type = #tpu.core_type<tc>, window_params = [{transform_indices = @transform_0, window_bounds = array<i64: 1, 3, 64>}, {pipeline_mode = #tpu.pipeline_mode<synchronous>, transform_indices = @transform_1, window_bounds = array<i64: 64, 3>}, {pipeline_mode = #tpu.pipeline_mode<synchronous>, transform_indices = @transform_2, window_bounds = array<i64: 64, 2>}, {pipeline_mode = #tpu.pipeline_mode<synchronous>, transform_indices = @transform_3, window_bounds = array<i64: 64, 1>}, {pipeline_mode = #tpu.pipeline_mode<synchronous>, transform_indices = @transform_4, window_bounds = array<i64: 32, 32>}, {pipeline_mode = #tpu.pipeline_mode<synchronous>, transform_indices = @transform_5, window_bounds = array<i64: 32, 1>}, {pipeline_mode = #tpu.pipeline_mode<synchronous>, transform_indices = @transform_6, window_bounds = array<i64: 96, 32>}, {pipeline_mode = #tpu.pipeline_mode<synchronous>, transform_indices = @transform_7, window_bounds = array<i64: 96, 32>}, {pipeline_mode = #tpu.pipeline_mode<synchronous>, transform_indices = @transform_8, window_bounds = array<i64: 96, 1>}, {transform_indices = @transform_9, window_bounds = array<i64: 1, 96, 64>}]} {
    %0 = tpu.iota {dimensions = array<i32: 1>} : vector<1x64xi32>
    %1 = arith.sitofp %0 : vector<1x64xi32> to vector<1x64xf32>
    %cst = arith.constant 5.000000e-01 : f32
    %2 = vector.broadcast %cst : f32 to vector<1x64xf32>
    %3 = arith.addf %1, %2 : vector<1x64xf32>
    %cst_0 = arith.constant 1.250000e-01 : f32
    %4 = vector.broadcast %cst_0 : f32 to vector<1x64xf32>
    %5 = arith.mulf %3, %4 : vector<1x64xf32>
    %6 = math.floor %5 : vector<1x64xf32>
    %cst_1 = arith.constant 8.000000e+00 : f32
    %7 = vector.broadcast %cst_1 : f32 to vector<1x64xf32>
    %8 = arith.mulf %6, %7 : vector<1x64xf32>
    %9 = arith.subf %1, %8 : vector<1x64xf32>
    %c8_i32 = arith.constant 8 : i32
    %10 = arith.muli %arg1, %c8_i32 : i32
    %11 = arith.sitofp %10 : i32 to f32
    %12 = vector.broadcast %11 : f32 to vector<1x64xf32>
    %13 = arith.addf %6, %12 : vector<1x64xf32>
    %cst_2 = arith.constant 7.000000e+00 : f32
    %14 = vector.broadcast %cst_2 : f32 to vector<1x64xf32>
    %15 = arith.subf %14, %13 : vector<1x64xf32>
    %cst_3 = arith.constant 2.000000e+00 : f32
    %16 = vector.broadcast %cst_3 : f32 to vector<1x64xf32>
    %17 = arith.mulf %16, %15 : vector<1x64xf32>
    %cst_4 = arith.constant 5.000000e-01 : f32
    %18 = vector.broadcast %cst_4 : f32 to vector<1x64xf32>
    %19 = arith.addf %17, %18 : vector<1x64xf32>
    %cst_5 = arith.constant 6.250000e-02 : f32
    %20 = vector.broadcast %cst_5 : f32 to vector<1x64xf32>
    %21 = arith.mulf %19, %20 : vector<1x64xf32>
    %cst_6 = arith.constant 2.000000e+00 : f32
    %22 = vector.broadcast %cst_6 : f32 to vector<1x64xf32>
    %23 = arith.mulf %22, %9 : vector<1x64xf32>
    %cst_7 = arith.constant 5.000000e-01 : f32
    %24 = vector.broadcast %cst_7 : f32 to vector<1x64xf32>
    %25 = arith.addf %23, %24 : vector<1x64xf32>
    %cst_8 = arith.constant 6.250000e-02 : f32
    %26 = vector.broadcast %cst_8 : f32 to vector<1x64xf32>
    %27 = arith.mulf %25, %26 : vector<1x64xf32>
    %c0 = arith.constant 0 : index
    %c0_9 = arith.constant 0 : index
    %c0_10 = arith.constant 0 : index
    %28 = vector.load %arg2[%c0, %c0_9, %c0_10] : memref<1x3x64xbf16, #tpu.memory_space<vmem>>, vector<1x3x64xbf16>
    %29 = vector.shape_cast %28 : vector<1x3x64xbf16> to vector<3x64xbf16>
    %c0_11 = arith.constant 0 : index
    %c0_12 = arith.constant 0 : index
    %30 = vector.load %arg4[%c0_11, %c0_12] : memref<64x2xf32, #tpu.memory_space<vmem>>, vector<64x2xf32>
    %c0_13 = arith.constant 0 : index
    %c0_14 = arith.constant 0 : index
    %31 = vector.load %arg3[%c0_13, %c0_14] : memref<64x3xbf16, #tpu.memory_space<vmem>>, vector<64x3xbf16>
    %cst_15 = arith.constant dense<0.000000e+00> : vector<64x64xf32>
    %32 = tpu.matmul %31, %29, %cst_15 {dimension_numbers = #tpu.dot_dimension_numbers<[1], [0], [0], [1], [0, 0, 1, 1], [], []>} : vector<64x3xbf16>, vector<3x64xbf16>, vector<64x64xf32> -> vector<64x64xf32>
    %33 = vector.extract_strided_slice %30 {offsets = [0, 0], sizes = [64, 1], strides = [1, 1]} : vector<64x2xf32> to vector<64x1xf32>
    %34 = vector.broadcast %33 : vector<64x1xf32> to vector<64x64xf32>
    %35 = vector.broadcast %21 : vector<1x64xf32> to vector<64x64xf32>
    %36 = arith.mulf %34, %35 : vector<64x64xf32>
    %37 = arith.addf %32, %36 : vector<64x64xf32>
    %38 = vector.extract_strided_slice %30 {offsets = [0, 1], sizes = [64, 1], strides = [1, 1]} : vector<64x2xf32> to vector<64x1xf32>
    %39 = vector.broadcast %38 : vector<64x1xf32> to vector<64x64xf32>
    %40 = vector.broadcast %27 : vector<1x64xf32> to vector<64x64xf32>
    %41 = arith.mulf %39, %40 : vector<64x64xf32>
    %42 = arith.addf %37, %41 : vector<64x64xf32>
    %c0_16 = arith.constant 0 : index
    %c0_17 = arith.constant 0 : index
    %43 = vector.load %arg5[%c0_16, %c0_17] : memref<64x1xf32, #tpu.memory_space<vmem>>, vector<64x1xf32>
    %44 = vector.broadcast %43 : vector<64x1xf32> to vector<64x64xf32>
    %45 = arith.addf %42, %44 : vector<64x64xf32>
    %cst_18 = arith.constant 0.000000e+00 : f32
    %46 = vector.broadcast %cst_18 : f32 to vector<64x64xf32>
    %47 = arith.maximumf %45, %46 : vector<64x64xf32>
    %48 = vector.extract_strided_slice %47 {offsets = [0, 0], sizes = [32, 64], strides = [1, 1]} : vector<64x64xf32> to vector<32x64xf32>
    %49 = vector.extract_strided_slice %47 {offsets = [32, 0], sizes = [32, 64], strides = [1, 1]} : vector<64x64xf32> to vector<32x64xf32>
    %c0_19 = arith.constant 0 : index
    %c0_20 = arith.constant 0 : index
    %50 = vector.load %arg6[%c0_19, %c0_20] : memref<32x32xbf16, #tpu.memory_space<vmem>>, vector<32x32xbf16>
    %51 = arith.truncf %48 : vector<32x64xf32> to vector<32x64xbf16>
    %cst_21 = arith.constant dense<0.000000e+00> : vector<32x64xf32>
    %52 = tpu.matmul %50, %51, %cst_21 {dimension_numbers = #tpu.dot_dimension_numbers<[1], [0], [0], [1], [0, 0, 1, 1], [], []>} : vector<32x32xbf16>, vector<32x64xbf16>, vector<32x64xf32> -> vector<32x64xf32>
    %c0_22 = arith.constant 0 : index
    %c0_23 = arith.constant 0 : index
    %53 = vector.load %arg7[%c0_22, %c0_23] : memref<32x1xf32, #tpu.memory_space<vmem>>, vector<32x1xf32>
    %54 = vector.broadcast %53 : vector<32x1xf32> to vector<32x64xf32>
    %55 = arith.addf %52, %54 : vector<32x64xf32>
    %cst_24 = arith.constant 0.000000e+00 : f32
    %56 = vector.broadcast %cst_24 : f32 to vector<32x64xf32>
    %57 = arith.maximumf %55, %56 : vector<32x64xf32>
    %c0_25 = arith.constant 0 : index
    %c0_26 = arith.constant 0 : index
    %58 = vector.load %arg8[%c0_25, %c0_26] : memref<96x32xbf16, #tpu.memory_space<vmem>>, vector<96x32xbf16>
    %59 = arith.truncf %57 : vector<32x64xf32> to vector<32x64xbf16>
    %cst_27 = arith.constant dense<0.000000e+00> : vector<96x64xf32>
    %60 = tpu.matmul %58, %59, %cst_27 {dimension_numbers = #tpu.dot_dimension_numbers<[1], [0], [0], [1], [0, 0, 1, 1], [], []>} : vector<96x32xbf16>, vector<32x64xbf16>, vector<96x64xf32> -> vector<96x64xf32>
    %c0_28 = arith.constant 0 : index
    %c0_29 = arith.constant 0 : index
    %61 = vector.load %arg9[%c0_28, %c0_29] : memref<96x32xbf16, #tpu.memory_space<vmem>>, vector<96x32xbf16>
    %62 = arith.truncf %49 : vector<32x64xf32> to vector<32x64xbf16>
    %cst_30 = arith.constant dense<0.000000e+00> : vector<96x64xf32>
    %63 = tpu.matmul %61, %62, %cst_30 {dimension_numbers = #tpu.dot_dimension_numbers<[1], [0], [0], [1], [0, 0, 1, 1], [], []>} : vector<96x32xbf16>, vector<32x64xbf16>, vector<96x64xf32> -> vector<96x64xf32>
    %64 = arith.addf %60, %63 : vector<96x64xf32>
    %c0_31 = arith.constant 0 : index
    %c0_32 = arith.constant 0 : index
    %65 = vector.load %arg10[%c0_31, %c0_32] : memref<96x1xf32, #tpu.memory_space<vmem>>, vector<96x1xf32>
    %66 = vector.broadcast %65 : vector<96x1xf32> to vector<96x64xf32>
    %67 = arith.addf %64, %66 : vector<96x64xf32>
    %68 = arith.truncf %67 : vector<96x64xf32> to vector<96x64xbf16>
    %c0_33 = arith.constant 0 : index
    %c0_34 = arith.constant 0 : index
    %c0_35 = arith.constant 0 : index
    %69 = vector.load %arg11[%c0_33, %c0_34, %c0_35] : memref<1x96x64xbf16, #tpu.memory_space<vmem>>, vector<1x96x64xbf16>
    %70 = vector.shape_cast %69 : vector<1x96x64xbf16> to vector<96x64xbf16>
    %71 = vector.shape_cast %68 : vector<96x64xbf16> to vector<1x96x64xbf16>
    tpu.vector_store %arg11[%c0_33, %c0_34, %c0_35], %71 {strides = array<i32>} : memref<1x96x64xbf16, #tpu.memory_space<vmem>>, vector<1x96x64xbf16>,
    return
  }
  func.func @transform_0(%arg0: i32, %arg1: i32) -> (i32, i32, i32) {
    %c0_i32 = arith.constant 0 : i32
    %c0_i32_0 = arith.constant 0 : i32
    return %arg0, %c0_i32, %arg1 : i32, i32, i32
  }
  func.func @transform_1(%arg0: i32, %arg1: i32) -> (i32, i32) {
    %c0_i32 = arith.constant 0 : i32
    %c0_i32_0 = arith.constant 0 : i32
    %c0_i32_1 = arith.constant 0 : i32
    return %c0_i32, %c0_i32_0 : i32, i32
  }
  func.func @transform_2(%arg0: i32, %arg1: i32) -> (i32, i32) {
    %c0_i32 = arith.constant 0 : i32
    %c0_i32_0 = arith.constant 0 : i32
    %c0_i32_1 = arith.constant 0 : i32
    return %c0_i32, %c0_i32_0 : i32, i32
  }
  func.func @transform_3(%arg0: i32, %arg1: i32) -> (i32, i32) {
    %c0_i32 = arith.constant 0 : i32
    %c0_i32_0 = arith.constant 0 : i32
    %c0_i32_1 = arith.constant 0 : i32
    return %c0_i32, %c0_i32_0 : i32, i32
  }
  func.func @transform_4(%arg0: i32, %arg1: i32) -> (i32, i32) {
    %c0_i32 = arith.constant 0 : i32
    %c0_i32_0 = arith.constant 0 : i32
    %c0_i32_1 = arith.constant 0 : i32
    return %c0_i32, %c0_i32_0 : i32, i32
  }
  func.func @transform_5(%arg0: i32, %arg1: i32) -> (i32, i32) {
    %c0_i32 = arith.constant 0 : i32
    %c0_i32_0 = arith.constant 0 : i32
    %c0_i32_1 = arith.constant 0 : i32
    return %c0_i32, %c0_i32_0 : i32, i32
  }
  func.func @transform_6(%arg0: i32, %arg1: i32) -> (i32, i32) {
    %c0_i32 = arith.constant 0 : i32
    %c0_i32_0 = arith.constant 0 : i32
    %c0_i32_1 = arith.constant 0 : i32
    return %c0_i32, %c0_i32_0 : i32, i32
  }
  func.func @transform_7(%arg0: i32, %arg1: i32) -> (i32, i32) {
    %c0_i32 = arith.constant 0 : i32
    %c0_i32_0 = arith.constant 0 : i32
    %c0_i32_1 = arith.constant 0 : i32
    return %c0_i32, %c0_i32_0 : i32, i32
  }
  func.func @transform_8(%arg0: i32, %arg1: i32) -> (i32, i32) {
    %c0_i32 = arith.constant 0 : i32
    %c0_i32_0 = arith.constant 0 : i32
    %c0_i32_1 = arith.constant 0 : i32
    return %c0_i32, %c0_i32_0 : i32, i32
  }
  func.func @transform_9(%arg0: i32, %arg1: i32) -> (i32, i32, i32) {
    %c0_i32 = arith.constant 0 : i32
    %c0_i32_0 = arith.constant 0 : i32
    return %arg0, %c0_i32, %arg1 : i32, i32, i32
  }
}

</mosaic_0001>

<llo_original>
// kernel: reverse
$region0: #{reverse}
  %s0 = inlined_call_operand.vmem [shape: f32[2,3,8,8], index: 0, kind: input, shape index: {}]
  %s1 = inlined_call_operand.vmem [shape: f32[2,3,8,8], index: 1, kind: output, shape index: {}]
  $region1: #{reverse} parent=0
    #allocation0 [shape = 'u8[24576]{0}', space=vmem, size = 0x6000, scoped, tag = 'operand span for operand 0']
    #allocation1 [shape = 'u8[24576]{0}', space=vmem, size = 0x6000, scoped, tag = 'operand span for operand 1']
    // Predicated region
    $region2: #{reverse} parent=1 // pred_check
      _
    $region3: #{reverse} parent=1 // pred_check_branch
      %3 = sbr.rel (0) target = $region5
    $region4: #{reverse} parent=1 // pred_region
      // Predicated region
      $region6: #{reverse} parent=4 // pred_check
        _
      $region7: #{reverse} parent=4 // pred_check_branch
        %5 = sbr.rel (0) target = $region9
      $region8: #{reverse} parent=4 // pred_region
        // Predicated region
        $region21: #{reverse} parent=8 // pred_check
          _
        $region22: #{reverse} parent=8 // pred_check_branch
          %30 = sbr.rel (0) target = $region24
        $region23: #{reverse} parent=8 // pred_region
          loop: start=0, step=1, limit=1
          $region25: #{reverse} parent=23 // loop_pre_header
            _
          $region26: #{reverse} parent=23 // loop_header
            %s32 = sphi 0, %s36
            %p33 = scmp.ge.s32.totalorder %s32, 1
            %s37 = sphi %s0, %s0
            %s38 = sphi [#allocation0], [#allocation0]
          $region27: #{reverse} parent=23 // loop_header_branch
            %35 = sbr.rel (%p33) target = $region31
          $region28: #{reverse} parent=23 // loop_body
            %v39 = vld [vmem:[%s37] sm:$0xff]
            %40 = vst [vmem:[%s38] sm:$0xff] %v39
            %v41 = vld [vmem:[%s37 + $0x8] sm:$0xff]
            %42 = vst [vmem:[%s38 + $0x8] sm:$0xff] %v41
            %v43 = vld [vmem:[%s37 + $0x10] sm:$0xff]
            %44 = vst [vmem:[%s38 + $0x10] sm:$0xff] %v43
            %v45 = vld [vmem:[%s37 + $0x18] sm:$0xff]
            %46 = vst [vmem:[%s38 + $0x18] sm:$0xff] %v45
            %v47 = vld [vmem:[%s37 + $0x20] sm:$0xff]
            %48 = vst [vmem:[%s38 + $0x20] sm:$0xff] %v47
            %v49 = vld [vmem:[%s37 + $0x28] sm:$0xff]
            %50 = vst [vmem:[%s38 + $0x28] sm:$0xff] %v49
          $region29: #{reverse} parent=23 // loop_footer
            %s36 = sadd.s32 1, %s32
          $region30: #{reverse} parent=23 // loop_footer_branch
            %31 = sbr.rel target = $region26
          $region31: #{reverse} parent=23 // loop_exit
            _
        $region24: #{reverse} parent=8 // pred_fallthru
          _
        // Predicated region
        $region32: #{reverse} parent=8 // pred_check
          _
        $region33: #{reverse} parent=8 // pred_check_branch
          %52 = sbr.rel target = $region35
        $region34: #{reverse} parent=8 // pred_region
          _
        $region35: #{reverse} parent=8 // pred_fallthru
          _
      $region9: #{reverse} parent=4 // pred_fallthru
        _
      // Predicated region
      $region10: #{reverse} parent=4 // pred_check
        _
      $region11: #{reverse} parent=4 // pred_check_branch
        %7 = sbr.rel target = $region13
      $region12: #{reverse} parent=4 // pred_region
        loop: start=0, step=1, limit=1
        $region14: #{reverse} parent=12 // loop_pre_header
          _
        $region15: #{reverse} parent=12 // loop_header
          %s10 = sphi 0, %s14
          %p11 = scmp.ge.s32.totalorder %s10, 1
          %s15 = sphi %s0, %s0
          %s16 = sphi [#allocation0], [#allocation0]
        $region16: #{reverse} parent=12 // loop_header_branch
          %13 = sbr.rel (%p11) target = $region20
        $region17: #{reverse} parent=12 // loop_body
          %v17 = vld [vmem:[%s15] sm:$0xff]
          %18 = vst [vmem:[%s16] sm:$0xff] %v17
          %v19 = vld [vmem:[%s15 + $0x8] sm:$0xff]
          %20 = vst [vmem:[%s16 + $0x8] sm:$0xff] %v19
          %v21 = vld [vmem:[%s15 + $0x10] sm:$0xff]
          %22 = vst [vmem:[%s16 + $0x10] sm:$0xff] %v21
          %v23 = vld [vmem:[%s15 + $0x18] sm:$0xff]
          %24 = vst [vmem:[%s16 + $0x18] sm:$0xff] %v23
          %v25 = vld [vmem:[%s15 + $0x20] sm:$0xff]
          %26 = vst [vmem:[%s16 + $0x20] sm:$0xff] %v25
          %v27 = vld [vmem:[%s15 + $0x28] sm:$0xff]
          %28 = vst [vmem:[%s16 + $0x28] sm:$0xff] %v27
        $region18: #{reverse} parent=12 // loop_footer
          %s14 = sadd.s32 1, %s10
        $region19: #{reverse} parent=12 // loop_footer_branch
          %9 = sbr.rel target = $region15
        $region20: #{reverse} parent=12 // loop_exit
          _
      $region13: #{reverse} parent=4 // pred_fallthru
        _
    $region5: #{reverse} parent=1 // pred_fallthru
      _
    %53 = vnop
    %s54 = scalar_lea.vmem [#allocation0], 7
    %v55 = vld [vmem:[%s54] ss:$-1 sm:$0xff]
    %56 = vst [vmem:[#allocation1] sm:$0xff] %v55
    %s57 = scalar_lea.vmem [#allocation1], 8
    %s58 = scalar_lea.vmem [#allocation0], 8
    %s59 = scalar_lea.vmem %s58, 7 [#allocation0]
    %v60 = vld [vmem:[%s59] ss:$-1 sm:$0xff]
    %61 = vst [vmem:[%s57] sm:$0xff] %v60
    %s62 = scalar_lea.vmem [#allocation1], 16
    %s63 = scalar_lea.vmem [#allocation0], 16
    %s64 = scalar_lea.vmem %s63, 7 [#allocation0]
    %v65 = vld [vmem:[%s64] ss:$-1 sm:$0xff]
    %66 = vst [vmem:[%s62] sm:$0xff] %v65
    %s67 = scalar_lea.vmem [#allocation1], 24
    %s68 = scalar_lea.vmem [#allocation0], 24
    %s69 = scalar_lea.vmem %s68, 7 [#allocation0]
    %v70 = vld [vmem:[%s69] ss:$-1 sm:$0xff]
    %71 = vst [vmem:[%s67] sm:$0xff] %v70
    %s72 = scalar_lea.vmem [#allocation1], 32
    %s73 = scalar_lea.vmem [#allocation0], 32
    %s74 = scalar_lea.vmem %s73, 7 [#allocation0]
    %v75 = vld [vmem:[%s74] ss:$-1 sm:$0xff]
    %76 = vst [vmem:[%s72] sm:$0xff] %v75
    %s77 = scalar_lea.vmem [#allocation1], 40
    %s78 = scalar_lea.vmem [#allocation0], 40
    %s79 = scalar_lea.vmem %s78, 7 [#allocation0]
    %v80 = vld [vmem:[%s79] ss:$-1 sm:$0xff]
    %81 = vst [vmem:[%s77] sm:$0xff] %v80
    // Predicated region
    $region36: #{reverse} parent=1 // pred_check
      _
    $region37: #{reverse} parent=1 // pred_check_branch
      %83 = sbr.rel (0) target = $region39
    $region38: #{reverse} parent=1 // pred_region
      // Predicated region
      $region40: #{reverse} parent=38 // pred_check
        _
      $region41: #{reverse} parent=38 // pred_check_branch
        %85 = sbr.rel (0) target = $region43
      $region42: #{reverse} parent=38 // pred_region
        // Predicated region
        $region55: #{reverse} parent=42 // pred_check
          _
        $region56: #{reverse} parent=42 // pred_check_branch
          %110 = sbr.rel (0) target = $region58
        $region57: #{reverse} parent=42 // pred_region
          loop: start=0, step=1, limit=1
          $region59: #{reverse} parent=57 // loop_pre_header
            _
          $region60: #{reverse} parent=57 // loop_header
            %s112 = sphi 0, %s116
            %p113 = scmp.ge.s32.totalorder %s112, 1
            %s117 = sphi [#allocation1], [#allocation1]
            %s118 = sphi %s1, %s1
          $region61: #{reverse} parent=57 // loop_header_branch
            %115 = sbr.rel (%p113) target = $region65
          $region62: #{reverse} parent=57 // loop_body
            %v119 = vld [vmem:[%s117] sm:$0xff]
            %120 = vst [vmem:[%s118] sm:$0xff] %v119
            %v121 = vld [vmem:[%s117 + $0x8] sm:$0xff]
            %122 = vst [vmem:[%s118 + $0x8] sm:$0xff] %v121
            %v123 = vld [vmem:[%s117 + $0x10] sm:$0xff]
            %124 = vst [vmem:[%s118 + $0x10] sm:$0xff] %v123
            %v125 = vld [vmem:[%s117 + $0x18] sm:$0xff]
            %126 = vst [vmem:[%s118 + $0x18] sm:$0xff] %v125
            %v127 = vld [vmem:[%s117 + $0x20] sm:$0xff]
            %128 = vst [vmem:[%s118 + $0x20] sm:$0xff] %v127
            %v129 = vld [vmem:[%s117 + $0x28] sm:$0xff]
            %130 = vst [vmem:[%s118 + $0x28] sm:$0xff] %v129
          $region63: #{reverse} parent=57 // loop_footer
            %s116 = sadd.s32 1, %s112
          $region64: #{reverse} parent=57 // loop_footer_branch
            %111 = sbr.rel target = $region60
          $region65: #{reverse} parent=57 // loop_exit
            _
        $region58: #{reverse} parent=42 // pred_fallthru
          _
        // Predicated region
        $region66: #{reverse} parent=42 // pred_check
          _
        $region67: #{reverse} parent=42 // pred_check_branch
          %132 = sbr.rel target = $region69
        $region68: #{reverse} parent=42 // pred_region
          _
        $region69: #{reverse} parent=42 // pred_fallthru
          _
      $region43: #{reverse} parent=38 // pred_fallthru
        _
      // Predicated region
      $region44: #{reverse} parent=38 // pred_check
        _
      $region45: #{reverse} parent=38 // pred_check_branch
        %87 = sbr.rel target = $region47
      $region46: #{reverse} parent=38 // pred_region
        loop: start=0, step=1, limit=1
        $region48: #{reverse} parent=46 // loop_pre_header
          _
        $region49: #{reverse} parent=46 // loop_header
          %s90 = sphi 0, %s94
          %p91 = scmp.ge.s32.totalorder %s90, 1
          %s95 = sphi [#allocation1], [#allocation1]
          %s96 = sphi %s1, %s1
        $region50: #{reverse} parent=46 // loop_header_branch
          %93 = sbr.rel (%p91) target = $region54
        $region51: #{reverse} parent=46 // loop_body
          %v97 = vld [vmem:[%s95] sm:$0xff]
          %98 = vst [vmem:[%s96] sm:$0xff] %v97
          %v99 = vld [vmem:[%s95 + $0x8] sm:$0xff]
          %100 = vst [vmem:[%s96 + $0x8] sm:$0xff] %v99
          %v101 = vld [vmem:[%s95 + $0x10] sm:$0xff]
          %102 = vst [vmem:[%s96 + $0x10] sm:$0xff] %v101
          %v103 = vld [vmem:[%s95 + $0x18] sm:$0xff]
          %104 = vst [vmem:[%s96 + $0x18] sm:$0xff] %v103
          %v105 = vld [vmem:[%s95 + $0x20] sm:$0xff]
          %106 = vst [vmem:[%s96 + $0x20] sm:$0xff] %v105
          %v107 = vld [vmem:[%s95 + $0x28] sm:$0xff]
          %108 = vst [vmem:[%s96 + $0x28] sm:$0xff] %v107
        $region52: #{reverse} parent=46 // loop_footer
          %s94 = sadd.s32 1, %s90
        $region53: #{reverse} parent=46 // loop_footer_branch
          %89 = sbr.rel target = $region49
        $region54: #{reverse} parent=46 // loop_exit
          _
      $region47: #{reverse} parent=38 // pred_fallthru
        _
    $region39: #{reverse} parent=1 // pred_fallthru
      _
    %133 = vnop

// kernel: img2plane_forward.1
$region0: #{img2plane_forward.1}
  #allocation0 [shape = 'u32[]', space=smem, size = 0x4, offset = 0x4, fixed_abs, tag = 'smem constant byte address 0x4 - core index']
  #allocation1 [shape = 'u32[144,128]{1,0:T(1,128)}', space=vmem, size = 0x12000, scoped, tag = 'internal scratch']
  %s0 = inlined_call_operand.vmem [shape: bf16[2,3,64], index: 0, kind: input, shape index: {}]
  %s1 = inlined_call_operand.vmem [shape: bf16[64,3], index: 1, kind: input, shape index: {}]
  %s2 = inlined_call_operand.vmem [shape: f32[64,2], index: 2, kind: input, shape index: {}]
  %s3 = inlined_call_operand.vmem [shape: f32[64,1], index: 3, kind: input, shape index: {}]
  %s4 = inlined_call_operand.vmem [shape: bf16[32,32], index: 4, kind: input, shape index: {}]
  %s5 = inlined_call_operand.vmem [shape: f32[32,1], index: 5, kind: input, shape index: {}]
  %s6 = inlined_call_operand.vmem [shape: bf16[96,32], index: 6, kind: input, shape index: {}]
  %s7 = inlined_call_operand.vmem [shape: bf16[96,32], index: 7, kind: input, shape index: {}]
  %s8 = inlined_call_operand.vmem [shape: f32[96,1], index: 8, kind: input, shape index: {}]
  %s9 = inlined_call_operand.vmem [shape: bf16[2,96,64], index: 9, kind: output, shape index: {}]
  %s10 = sld [smem:[#allocation0]]
  $region69: #{img2plane_forward.1} parent=0
    _
  %s12 = ssub.s32 1, %s10
  %s13 = scalar_select 0, %s12, %s10
  loop: start=0, step=1, limit=4
  $region2: #{img2plane_forward.1} parent=0 // loop_pre_header
    _
  $region3: #{img2plane_forward.1} parent=0 // loop_header
    %s15 = sphi 0, %s19
    %p16 = scmp.ge.s32.totalorder %s15, 4
    %s22 = sphi 0, %s34
    %s23 = sphi 0, %s30
    %s24 = sphi 0, %s22
    %s25 = sphi 0, %s23
    %s26 = sphi 0, %s24
    %s27 = sphi 0, %s25
    %s39 = sphi 0, %s41
    %s42 = sphi 0, %s39
    %s43 = sphi 0, %s42
    %s59 = sphi 0, %s43
    %s63 = sphi 0, %s63
    %s65 = sphi 0, %s63
    %s66 = sphi 0, %s65
    %s80 = sphi 0, %s66
    %s84 = sphi 0, %s84
    %s86 = sphi 0, %s84
    %s87 = sphi 0, %s86
    %s101 = sphi 0, %s87
    %s105 = sphi 0, %s105
    %s107 = sphi 0, %s105
    %s108 = sphi 0, %s107
    %s122 = sphi 0, %s108
    %s126 = sphi 0, %s126
    %s128 = sphi 0, %s126
    %s129 = sphi 0, %s128
    %s143 = sphi 0, %s129
    %s147 = sphi 0, %s147
    %s149 = sphi 0, %s147
    %s150 = sphi 0, %s149
    %s164 = sphi 0, %s150
    %s168 = sphi 0, %s168
    %s170 = sphi 0, %s168
    %s171 = sphi 0, %s170
    %s185 = sphi 0, %s171
    %s189 = sphi 0, %s189
    %s191 = sphi 0, %s189
    %s192 = sphi 0, %s191
    %s206 = sphi 0, %s192
    %s210 = sphi 0, %s210
    %s212 = sphi 0, %s210
    %s213 = sphi 0, %s212
    %s227 = sphi 0, %s213
    %s235 = sphi 0, %s237
    %s238 = sphi 0, %s235
    %s239 = sphi 0, %s238
    %s255 = sphi 0, %s239
  $region4: #{img2plane_forward.1} parent=0 // loop_header_branch
    %18 = sbr.rel (%p16) target = $region8
  $region5: #{img2plane_forward.1} parent=0 // loop_body
    %s20 = ssub.s32 %s15, 1
    %s21 = ssub.s32 %s15, 2
    %s28 = sadd.s32 1, %s23
    %p29 = scmp.ge.s32.totalorder %s28, 1
    %s30 = scalar_select %p29, 0, %s28
    %s31 = sadd.s32 1, %s22
    %s32 = scalar_select %p29, %s31, %s22
    %p33 = scmp.ge.s32.totalorder %s32, 2
    %s34 = scalar_select %p33, 0, %s32
    %s35 = ssub.s32 %s22, %s34
    %s36 = ssub.s32 %s23, %s30
    %s37 = sor.u32 %s35, %s36
    %p38 = scmp.eq.s32.totalorder %s37, 0
    %s40 = sadd.s32 %s39, 1
    %s41 = scalar_select %p38, %s39, %s40
    %p44 = pneg %p38
    %p45 = scmp.eq.s32.totalorder %s15, 1
    %p46 = por %p44, %p45
    %p47 = scmp.ne.s32.totalorder %s39, %s42
    %p48 = scmp.eq.s32.totalorder %s15, 0
    %p49 = por %p47, %p48
    %p50 = scmp.ne.s32.totalorder %s39, %s42
    %p51 = scmp.eq.s32.totalorder %s20, 1
    %p52 = por %p50, %p51
    %p53 = scmp.ne.s32.totalorder %s42, %s43
    %p54 = scmp.eq.s32.totalorder %s20, 0
    %p55 = por %p53, %p54
    %p56 = scmp.ne.s32.totalorder %s42, %s43
    %p57 = scmp.eq.s32.totalorder %s21, 1
    %p58 = por %p56, %p57
    %p60 = scmp.ne.s32.totalorder %s43, %s59
    %p61 = scmp.eq.s32.totalorder %s21, 0
    %p62 = por %p60, %p61
    %s64 = sadd.s32 %s63, 1
    %p67 = scmp.eq.s32.totalorder %s15, 1
    %p68 = scmp.ne.s32.totalorder %s63, %s65
    %p69 = scmp.eq.s32.totalorder %s15, 0
    %p70 = por %p68, %p69
    %p71 = scmp.ne.s32.totalorder %s63, %s65
    %p72 = scmp.eq.s32.totalorder %s20, 1
    %p73 = por %p71, %p72
    %p74 = scmp.ne.s32.totalorder %s65, %s66
    %p75 = scmp.eq.s32.totalorder %s20, 0
    %p76 = por %p74, %p75
    %p77 = scmp.ne.s32.totalorder %s65, %s66
    %p78 = scmp.eq.s32.totalorder %s21, 1
    %p79 = por %p77, %p78
    %p81 = scmp.ne.s32.totalorder %s66, %s80
    %p82 = scmp.eq.s32.totalorder %s21, 0
    %p83 = por %p81, %p82
    %s85 = sadd.s32 %s84, 1
    %p88 = scmp.eq.s32.totalorder %s15, 1
    %p89 = scmp.ne.s32.totalorder %s84, %s86
    %p90 = scmp.eq.s32.totalorder %s15, 0
    %p91 = por %p89, %p90
    %p92 = scmp.ne.s32.totalorder %s84, %s86
    %p93 = scmp.eq.s32.totalorder %s20, 1
    %p94 = por %p92, %p93
    %p95 = scmp.ne.s32.totalorder %s86, %s87
    %p96 = scmp.eq.s32.totalorder %s20, 0
    %p97 = por %p95, %p96
    %p98 = scmp.ne.s32.totalorder %s86, %s87
    %p99 = scmp.eq.s32.totalorder %s21, 1
    %p100 = por %p98, %p99
    %p102 = scmp.ne.s32.totalorder %s87, %s101
    %p103 = scmp.eq.s32.totalorder %s21, 0
    %p104 = por %p102, %p103
    %s106 = sadd.s32 %s105, 1
    %p109 = scmp.eq.s32.totalorder %s15, 1
    %p110 = scmp.ne.s32.totalorder %s105, %s107
    %p111 = scmp.eq.s32.totalorder %s15, 0
    %p112 = por %p110, %p111
    %p113 = scmp.ne.s32.totalorder %s105, %s107
    %p114 = scmp.eq.s32.totalorder %s20, 1
    %p115 = por %p113, %p114
    %p116 = scmp.ne.s32.totalorder %s107, %s108
    %p117 = scmp.eq.s32.totalorder %s20, 0
    %p118 = por %p116, %p117
    %p119 = scmp.ne.s32.totalorder %s107, %s108
    %p120 = scmp.eq.s32.totalorder %s21, 1
    %p121 = por %p119, %p120
    %p123 = scmp.ne.s32.totalorder %s108, %s122
    %p124 = scmp.eq.s32.totalorder %s21, 0
    %p125 = por %p123, %p124
    %s127 = sadd.s32 %s126, 1
    %p130 = scmp.eq.s32.totalorder %s15, 1
    %p131 = scmp.ne.s32.totalorder %s126, %s128
    %p132 = scmp.eq.s32.totalorder %s15, 0
    %p133 = por %p131, %p132
    %p134 = scmp.ne.s32.totalorder %s126, %s128
    %p135 = scmp.eq.s32.totalorder %s20, 1
    %p136 = por %p134, %p135
    %p137 = scmp.ne.s32.totalorder %s128, %s129
    %p138 = scmp.eq.s32.totalorder %s20, 0
    %p139 = por %p137, %p138
    %p140 = scmp.ne.s32.totalorder %s128, %s129
    %p141 = scmp.eq.s32.totalorder %s21, 1
    %p142 = por %p140, %p141
    %p144 = scmp.ne.s32.totalorder %s129, %s143
    %p145 = scmp.eq.s32.totalorder %s21, 0
    %p146 = por %p144, %p145
    %s148 = sadd.s32 %s147, 1
    %p151 = scmp.eq.s32.totalorder %s15, 1
    %p152 = scmp.ne.s32.totalorder %s147, %s149
    %p153 = scmp.eq.s32.totalorder %s15, 0
    %p154 = por %p152, %p153
    %p155 = scmp.ne.s32.totalorder %s147, %s149
    %p156 = scmp.eq.s32.totalorder %s20, 1
    %p157 = por %p155, %p156
    %p158 = scmp.ne.s32.totalorder %s149, %s150
    %p159 = scmp.eq.s32.totalorder %s20, 0
    %p160 = por %p158, %p159
    %p161 = scmp.ne.s32.totalorder %s149, %s150
    %p162 = scmp.eq.s32.totalorder %s21, 1
    %p163 = por %p161, %p162
    %p165 = scmp.ne.s32.totalorder %s150, %s164
    %p166 = scmp.eq.s32.totalorder %s21, 0
    %p167 = por %p165, %p166
    %s169 = sadd.s32 %s168, 1
    %p172 = scmp.eq.s32.totalorder %s15, 1
    %p173 = scmp.ne.s32.totalorder %s168, %s170
    %p174 = scmp.eq.s32.totalorder %s15, 0
    %p175 = por %p173, %p174
    %p176 = scmp.ne.s32.totalorder %s168, %s170
    %p177 = scmp.eq.s32.totalorder %s20, 1
    %p178 = por %p176, %p177
    %p179 = scmp.ne.s32.totalorder %s170, %s171
    %p180 = scmp.eq.s32.totalorder %s20, 0
    %p181 = por %p179, %p180
    %p182 = scmp.ne.s32.totalorder %s170, %s171
    %p183 = scmp.eq.s32.totalorder %s21, 1
    %p184 = por %p182, %p183
    %p186 = scmp.ne.s32.totalorder %s171, %s185
    %p187 = scmp.eq.s32.totalorder %s21, 0
    %p188 = por %p186, %p187
    %s190 = sadd.s32 %s189, 1
    %p193 = scmp.eq.s32.totalorder %s15, 1
    %p194 = scmp.ne.s32.totalorder %s189, %s191
    %p195 = scmp.eq.s32.totalorder %s15, 0
    %p196 = por %p194, %p195
    %p197 = scmp.ne.s32.totalorder %s189, %s191
    %p198 = scmp.eq.s32.totalorder %s20, 1
    %p199 = por %p197, %p198
    %p200 = scmp.ne.s32.totalorder %s191, %s192
    %p201 = scmp.eq.s32.totalorder %s20, 0
    %p202 = por %p200, %p201
    %p203 = scmp.ne.s32.totalorder %s191, %s192
    %p204 = scmp.eq.s32.totalorder %s21, 1
    %p205 = por %p203, %p204
    %p207 = scmp.ne.s32.totalorder %s192, %s206
    %p208 = scmp.eq.s32.totalorder %s21, 0
    %p209 = por %p207, %p208
    %s211 = sadd.s32 %s210, 1
    %p214 = scmp.eq.s32.totalorder %s15, 1
    %p215 = scmp.ne.s32.totalorder %s210, %s212
    %p216 = scmp.eq.s32.totalorder %s15, 0
    %p217 = por %p215, %p216
    %p218 = scmp.ne.s32.totalorder %s210, %s212
    %p219 = scmp.eq.s32.totalorder %s20, 1
    %p220 = por %p218, %p219
    %p221 = scmp.ne.s32.totalorder %s212, %s213
    %p222 = scmp.eq.s32.totalorder %s20, 0
    %p223 = por %p221, %p222
    %p224 = scmp.ne.s32.totalorder %s212, %s213
    %p225 = scmp.eq.s32.totalorder %s21, 1
    %p226 = por %p224, %p225
    %p228 = scmp.ne.s32.totalorder %s213, %s227
    %p229 = scmp.eq.s32.totalorder %s21, 0
    %p230 = por %p228, %p229
    %s231 = ssub.s32 %s22, %s34
    %s232 = ssub.s32 %s23, %s30
    %s233 = sor.u32 %s231, %s232
    %p234 = scmp.eq.s32.totalorder %s233, 0
    %s236 = sadd.s32 %s235, 1
    %s237 = scalar_select %p234, %s235, %s236
    %p240 = pneg %p234
    %p241 = scmp.eq.s32.totalorder %s15, 1
    %p242 = por %p240, %p241
    %p243 = scmp.ne.s32.totalorder %s235, %s238
    %p244 = scmp.eq.s32.totalorder %s15, 0
    %p245 = por %p243, %p244
    %p246 = scmp.ne.s32.totalorder %s235, %s238
    %p247 = scmp.eq.s32.totalorder %s20, 1
    %p248 = por %p246, %p247
    %p249 = scmp.ne.s32.totalorder %s238, %s239
    %p250 = scmp.eq.s32.totalorder %s20, 0
    %p251 = por %p249, %p250
    %p252 = scmp.ne.s32.totalorder %s238, %s239
    %p253 = scmp.eq.s32.totalorder %s21, 1
    %p254 = por %p252, %p253
    %p256 = scmp.ne.s32.totalorder %s239, %s255
    %p257 = scmp.eq.s32.totalorder %s21, 0
    %p258 = por %p256, %p257
    %p259 = scmp.le.s32.totalorder 1, %s15
    %p260 = scmp.lt.s32.totalorder %s15, 3
    %p261 = pnand %p259, %p260
    %p262 = pneg %p261
    // Predicated region
    $region9: #{img2plane_forward.1} parent=5 // pred_check
      _
    $region10: #{img2plane_forward.1} parent=5 // pred_check_branch
      %264 = sbr.rel (%p261) target = $region12
    $region11: #{img2plane_forward.1} parent=5 // pred_region
      %s265 = ssub.s32 %s15, 1
      // Predicated region
      $region13: #{img2plane_forward.1} parent=11 // pred_check
        %p266 = pneg %p76
      $region14: #{img2plane_forward.1} parent=11 // pred_check_branch
        %268 = sbr.rel (%p266) target = $region16
      $region15: #{img2plane_forward.1} parent=11 // pred_region
        _
      $region16: #{img2plane_forward.1} parent=11 // pred_fallthru
        _
      // Predicated region
      $region17: #{img2plane_forward.1} parent=11 // pred_check
        %p269 = pneg %p97
      $region18: #{img2plane_forward.1} parent=11 // pred_check_branch
        %271 = sbr.rel (%p269) target = $region20
      $region19: #{img2plane_forward.1} parent=11 // pred_region
        _
      $region20: #{img2plane_forward.1} parent=11 // pred_fallthru
        _
      // Predicated region
      $region21: #{img2plane_forward.1} parent=11 // pred_check
        %p272 = pneg %p118
      $region22: #{img2plane_forward.1} parent=11 // pred_check_branch
        %274 = sbr.rel (%p272) target = $region24
      $region23: #{img2plane_forward.1} parent=11 // pred_region
        _
      $region24: #{img2plane_forward.1} parent=11 // pred_fallthru
        _
      // Predicated region
      $region25: #{img2plane_forward.1} parent=11 // pred_check
        %p275 = pneg %p139
      $region26: #{img2plane_forward.1} parent=11 // pred_check_branch
        %277 = sbr.rel (%p275) target = $region28
      $region27: #{img2plane_forward.1} parent=11 // pred_region
        _
      $region28: #{img2plane_forward.1} parent=11 // pred_fallthru
        _
      // Predicated region
      $region29: #{img2plane_forward.1} parent=11 // pred_check
        %p278 = pneg %p160
      $region30: #{img2plane_forward.1} parent=11 // pred_check_branch
        %280 = sbr.rel (%p278) target = $region32
      $region31: #{img2plane_forward.1} parent=11 // pred_region
        _
      $region32: #{img2plane_forward.1} parent=11 // pred_fallthru
        _
      // Predicated region
      $region33: #{img2plane_forward.1} parent=11 // pred_check
        %p281 = pneg %p181
      $region34: #{img2plane_forward.1} parent=11 // pred_check_branch
        %283 = sbr.rel (%p281) target = $region36
      $region35: #{img2plane_forward.1} parent=11 // pred_region
        _
      $region36: #{img2plane_forward.1} parent=11 // pred_fallthru
        _
      // Predicated region
      $region37: #{img2plane_forward.1} parent=11 // pred_check
        %p284 = pneg %p202
      $region38: #{img2plane_forward.1} parent=11 // pred_check_branch
        %286 = sbr.rel (%p284) target = $region40
      $region39: #{img2plane_forward.1} parent=11 // pred_region
        _
      $region40: #{img2plane_forward.1} parent=11 // pred_fallthru
        _
      // Predicated region
      $region41: #{img2plane_forward.1} parent=11 // pred_check
        %p287 = pneg %p223
      $region42: #{img2plane_forward.1} parent=11 // pred_check_branch
        %289 = sbr.rel (%p287) target = $region44
      $region43: #{img2plane_forward.1} parent=11 // pred_region
        _
      $region44: #{img2plane_forward.1} parent=11 // pred_fallthru
        _
    $region12: #{img2plane_forward.1} parent=5 // pred_fallthru
      _
    %p290 = scmp.lt.s32.totalorder %s15, 2
    // Predicated region
    $region45: #{img2plane_forward.1} parent=5 // pred_check
      %p291 = pneg %p290
    $region46: #{img2plane_forward.1} parent=5 // pred_check_branch
      %293 = sbr.rel (%p291) target = $region48
    $region47: #{img2plane_forward.1} parent=5 // pred_region
      // Predicated region
      $region49: #{img2plane_forward.1} parent=47 // pred_check
        %p294 = pneg %p49
      $region50: #{img2plane_forward.1} parent=47 // pred_check_branch
        %296 = sbr.rel (%p294) target = $region52
      $region51: #{img2plane_forward.1} parent=47 // pred_region
        %p297 = scmp.lt.s32.totalorder %s22, 1
        %s298 = scalar_select %p297, %s22, 1
        %p299 = scmp.lt.s32.totalorder %s23, 0
        %s300 = scalar_select %p299, %s23, 0
        %s301 = sadd.s32 %s300, %s298
        %s302 = smul.addr %s301, 2
        %s303 = scalar_lea.vmem %s0, %s302
      $region52: #{img2plane_forward.1} parent=47 // pred_fallthru
        _
    $region48: #{img2plane_forward.1} parent=5 // pred_fallthru
      _
    %p304 = scmp.le.s32.totalorder 1, %s15
    %p305 = scmp.lt.s32.totalorder %s15, 3
    %p306 = pnand %p304, %p305
    %p307 = pneg %p306
    // Predicated region
    $region53: #{img2plane_forward.1} parent=5 // pred_check
      _
    $region54: #{img2plane_forward.1} parent=5 // pred_check_branch
      %309 = sbr.rel (%p306) target = $region56
    $region55: #{img2plane_forward.1} parent=5 // pred_region
      %s310 = ssub.s32 %s15, 1
      %p311 = scmp.lt.s32.totalorder %s24, 1
      %s312 = scalar_select %p311, %s24, 1
      %p313 = scmp.lt.s32.totalorder %s25, 0
      %s314 = scalar_select %p313, %s25, 0
      %s315 = sadd.s32 %s314, %s312
      %s316 = smul.addr %s315, 2
      %s317 = scalar_lea.vmem %s0, %s316
      %p318 = pneg %p55
      %p319 = pneg %p52
      %p320 = pneg %p76
      %p321 = pneg %p73
      %p322 = pneg %p97
      %p323 = pneg %p94
      %p324 = pneg %p118
      %p325 = pneg %p115
      %p326 = pneg %p139
      %p327 = pneg %p136
      %p328 = pneg %p160
      %p329 = pneg %p157
      %p330 = pneg %p181
      %p331 = pneg %p178
      %p332 = pneg %p202
      %p333 = pneg %p199
      %p334 = pneg %p223
      %p335 = pneg %p220
      %p336 = pneg %p251
      %p337 = pneg %p248
      %p338 = scmp.lt.s32.totalorder %s24, 1
      %s339 = scalar_select %p338, %s24, 1
      %p340 = scmp.lt.s32.totalorder %s25, 0
      %s341 = scalar_select %p340, %s25, 0
      %s342 = smul.addr %s339, 12
      %s343 = sadd.s32 %s341, %s342
      %s344 = smul.addr %s343, 4
      %s345 = scalar_lea.vmem %s9, %s344
      %p346 = scmp.lt.s32.totalorder %s24, 1
      %s347 = scalar_select %p346, %s24, 1
      %p348 = scmp.lt.s32.totalorder %s25, 0
      %s349 = scalar_select %p348, %s25, 0
      %s350 = sadd.s32 %s349, %s347
      %s351 = smul.addr %s350, 2
      %s352 = scalar_lea.vmem %s0, %s351
      %p353 = scmp.lt.s32.totalorder %s24, 1
      %s354 = scalar_select %p353, %s24, 1
      %p355 = scmp.lt.s32.totalorder %s25, 0
      %s356 = scalar_select %p355, %s25, 0
      %s357 = smul.addr %s354, 12
      %s358 = sadd.s32 %s356, %s357
      %s359 = smul.addr %s358, 4
      %s360 = scalar_lea.vmem %s9, %s359
      %v362 = vlaneseq
      %v363 = vand.u32 %v362, 127
      %v364 = vcvt.s32.f32 %v363
      %v365 = vadd.f32 %v364, 0.5
      %v366 = vmul.f32 %v365, 0.125
      %v367 = vfloor.f32 %v366
      %v368 = vmul.f32 %v367, 8.0
      %v369 = vsub.f32 %v364, %v368
      %s370 = smul.u32 %s25, 8
      %s371 = scvt.s32.f32 %s370
      %v372 = vstv %s371
      %v373 = vadd.f32 %v367, %v372
      %v374 = vsub.f32 7.0, %v373
      %v375 = vmul.f32 %v374, 2.0
      %v376 = vadd.f32 %v375, 0.5
      %v377 = vmul.f32 %v376, 0.0625
      %v378 = vmul.f32 %v369, 2.0
      %v379 = vadd.f32 %v378, 0.5
      %v380 = vmul.f32 %v379, 0.0625
      %v381 = vld [vmem:[%s352] sm:$0x3]
      %v382 = vld [vmem:[%s2] sm:$0xff]
      %v383 = vld [vmem:[%s2 + $0x8] sm:$0xff]
      %v384 = vld [vmem:[%s2 + $0x10] sm:$0xff]
      %v385 = vld [vmem:[%s2 + $0x18] sm:$0xff]
      %v386 = vld [vmem:[%s2 + $0x20] sm:$0xff]
      %v387 = vld [vmem:[%s2 + $0x28] sm:$0xff]
      %v388 = vld [vmem:[%s2 + $0x30] sm:$0xff]
      %v389 = vld [vmem:[%s2 + $0x38] sm:$0xff]
      %v390 = vld [vmem:[%s1] sm:$0xf]
      %v391 = vld [vmem:[%s1 + $0x4] sm:$0xf]
      %v392 = vld [vmem:[%s1 + $0x8] sm:$0xf]
      %v393 = vld [vmem:[%s1 + $0xc] sm:$0xf]
      %v394 = vld [vmem:[%s1 + $0x10] sm:$0xf]
      %v395 = vld [vmem:[%s1 + $0x14] sm:$0xf]
      %v396 = vld [vmem:[%s1 + $0x18] sm:$0xf]
      %v397 = vld [vmem:[%s1 + $0x1c] sm:$0xf]
      %399 = vset.pattern.permute.xlu0 0
      %400 = vperm.xlu0 %399, %v382
      %v401 = vpop.permute.xlu0 %400
      %404 = vset.pattern.permute.xlu0 0
      %405 = vperm.xlu0 %404, %v383
      %v406 = vpop.permute.xlu0 %405
      %409 = vset.pattern.permute.xlu0 0
      %410 = vperm.xlu0 %409, %v384
      %v411 = vpop.permute.xlu0 %410
      %414 = vset.pattern.permute.xlu0 0
      %415 = vperm.xlu0 %414, %v385
      %v416 = vpop.permute.xlu0 %415
      %419 = vset.pattern.permute.xlu0 0
      %420 = vperm.xlu0 %419, %v386
      %v421 = vpop.permute.xlu0 %420
      %424 = vset.pattern.permute.xlu0 0
      %425 = vperm.xlu0 %424, %v387
      %v426 = vpop.permute.xlu0 %425
      %429 = vset.pattern.permute.xlu0 0
      %430 = vperm.xlu0 %429, %v388
      %v431 = vpop.permute.xlu0 %430
      %434 = vset.pattern.permute.xlu0 0
      %435 = vperm.xlu0 %434, %v389
      %v436 = vpop.permute.xlu0 %435
      %v438 = vmul.f32 %v401, %v377
      %v439 = vmul.f32 %v406, %v377
      %v440 = vmul.f32 %v411, %v377
      %v441 = vmul.f32 %v416, %v377
      %v442 = vmul.f32 %v421, %v377
      %v443 = vmul.f32 %v426, %v377
      %v444 = vmul.f32 %v431, %v377
      %v445 = vmul.f32 %v436, %v377
      %v454 = vunpack.c.l.b16 %v390
      %v455 = vunpack.c.l.b16 %v391
      %v456 = vunpack.c.l.b16 %v392
      %v457 = vunpack.c.l.b16 %v393
      %v458 = vunpack.c.l.b16 %v394
      %v459 = vunpack.c.l.b16 %v395
      %v460 = vunpack.c.l.b16 %v396
      %v461 = vunpack.c.l.b16 %v397
      %v462 = vpack.c.b16 %v455, %v454
      %v463 = vpack.c.b16 %v457, %v456
      %v464 = vpack.c.b16 %v459, %v458
      %v465 = vpack.c.b16 %v461, %v460
      %vm466 = vcmask 23552
      %v468 = vsel %vm466, %v462, 0
      %v471 = vsel %vm466, %v463, 0
      %v474 = vsel %vm466, %v464, 0
      %v477 = vsel %vm466, %v465, 0
      %vm479 = vcmask 1040384
      %vm480 = vcmask 1041408
      %v481 = vsel %vm479, 4294967295, 65535
      %v482 = vsel %vm480, %v481, 0
      %v484 = vand.u32 %v381, %v482
      %486 = vmatprep.subr.bf16.mxu0 0
      %487 = vmatpush1.bf16.msra.mxu0 %v484
      %488 = vmatprep.subr.bf16.mxu0 0
      %489 = vmatpush1.bf16.msra.mxu0 0
      %490 = vmatprep.subr.bf16.mxu0 0
      %491 = vmatpush1.bf16.msra.mxu0 0
      %492 = vmatprep.subr.bf16.mxu0 0
      %493 = vmatpush1.bf16.msra.mxu0 0
      %494 = vmatprep.subr.bf16.mxu0 0
      %495 = vmatpush1.bf16.msra.mxu0 0
      %496 = vmatprep.subr.bf16.mxu0 0
      %497 = vmatpush1.bf16.msra.mxu0 0
      %498 = vmatprep.subr.bf16.mxu0 0
      %499 = vmatpush1.bf16.msra.mxu0 0
      %500 = vmatprep.subr.bf16.mxu0 0
      %501 = vmatpush1.bf16.msra.mxu0 0
      %502 = vmatprep.subr.bf16.mxu0 0
      %503 = vmatpush1.bf16.msra.mxu0 0
      %504 = vmatprep.subr.bf16.mxu0 0
      %505 = vmatpush1.bf16.msra.mxu0 0
      %506 = vmatprep.subr.bf16.mxu0 0
      %507 = vmatpush1.bf16.msra.mxu0 0
      %508 = vmatprep.subr.bf16.mxu0 0
      %509 = vmatpush1.bf16.msra.mxu0 0
      %510 = vmatprep.subr.bf16.mxu0 0
      %511 = vmatpush1.bf16.msra.mxu0 0
      %512 = vmatprep.subr.bf16.mxu0 0
      %513 = vmatpush1.bf16.msra.mxu0 0
      %514 = vmatprep.subr.bf16.mxu0 0
      %515 = vmatpush1.bf16.msra.mxu0 0
      %516 = vmatprep.subr.bf16.mxu0 0
      %517 = vmatpush1.bf16.msra.mxu0 0
      %518 = vmatprep.mubr.bf16.mxu0 0
      %519 = vmatmul.mubr.bf16.gmra.mrb[0].mxu0 %v468
      %v520 = vpop.f32.mrb[0].mxu0
      %v521 = vadd.f32 %v438, %v520
      %v522 = vpop.f32.mrb[0].mxu0
      %v523 = vpop.f32.mrb[0].mxu0
      %v524 = vadd.f32 %v439, %v523
      %v525 = vpop.f32.mrb[0].mxu0
      %526 = vmatprep.mubr.bf16.mxu0 0
      %527 = vmatmul.mubr.bf16.gmra.mrb[0].mxu0 %v471
      %v528 = vpop.f32.mrb[0].mxu0
      %v529 = vadd.f32 %v440, %v528
      %v530 = vpop.f32.mrb[0].mxu0
      %v531 = vpop.f32.mrb[0].mxu0
      %v532 = vadd.f32 %v441, %v531
      %v533 = vpop.f32.mrb[0].mxu0
      %534 = vmatprep.mubr.bf16.mxu0 0
      %535 = vmatmul.mubr.bf16.gmra.mrb[0].mxu0 %v474
      %v536 = vpop.f32.mrb[0].mxu0
      %v537 = vadd.f32 %v442, %v536
      %v538 = vpop.f32.mrb[0].mxu0
      %v539 = vpop.f32.mrb[0].mxu0
      %v540 = vadd.f32 %v443, %v539
      %v541 = vpop.f32.mrb[0].mxu0
      %542 = vmatprep.mubr.bf16.mxu0 0
      %543 = vmatmul.mubr.bf16.gmra.mrb[0].mxu0 %v477
      %v544 = vpop.f32.mrb[0].mxu0
      %v545 = vadd.f32 %v444, %v544
      %v546 = vpop.f32.mrb[0].mxu0
      %v547 = vpop.f32.mrb[0].mxu0
      %v548 = vadd.f32 %v445, %v547
      %v549 = vpop.f32.mrb[0].mxu0
      %550 = vdwg.mxu0
      %551 = vset.pattern.permute.xlu0 1
      %552 = vperm.xlu0 %551, %v382
      %v553 = vpop.permute.xlu0 %552
      %555 = vset.pattern.permute.xlu0 1
      %556 = vperm.xlu0 %555, %v383
      %v557 = vpop.permute.xlu0 %556
      %559 = vset.pattern.permute.xlu0 1
      %560 = vperm.xlu0 %559, %v384
      %v561 = vpop.permute.xlu0 %560
      %563 = vset.pattern.permute.xlu0 1
      %564 = vperm.xlu0 %563, %v385
      %v565 = vpop.permute.xlu0 %564
      %567 = vset.pattern.permute.xlu0 1
      %568 = vperm.xlu0 %567, %v386
      %v569 = vpop.permute.xlu0 %568
      %571 = vset.pattern.permute.xlu0 1
      %572 = vperm.xlu0 %571, %v387
      %v573 = vpop.permute.xlu0 %572
      %575 = vset.pattern.permute.xlu0 1
      %576 = vperm.xlu0 %575, %v388
      %v577 = vpop.permute.xlu0 %576
      %579 = vset.pattern.permute.xlu0 1
      %580 = vperm.xlu0 %579, %v389
      %v581 = vpop.permute.xlu0 %580
      %v583 = vmul.f32 %v553, %v380
      %v584 = vmul.f32 %v557, %v380
      %v585 = vmul.f32 %v561, %v380
      %v586 = vmul.f32 %v565, %v380
      %v587 = vmul.f32 %v569, %v380
      %v588 = vmul.f32 %v573, %v380
      %v589 = vmul.f32 %v577, %v380
      %v590 = vmul.f32 %v581, %v380
      %v591 = vadd.f32 %v521, %v583
      %v592 = vadd.f32 %v524, %v584
      %v593 = vadd.f32 %v529, %v585
      %v594 = vadd.f32 %v532, %v586
      %v595 = vadd.f32 %v537, %v587
      %v596 = vadd.f32 %v540, %v588
      %v597 = vadd.f32 %v545, %v589
      %v598 = vadd.f32 %v548, %v590
      %v599 = vld [vmem:[%s3] sm:$0xff]
      %v600 = vld [vmem:[%s3 + $0x8] sm:$0xff]
      %v601 = vld [vmem:[%s3 + $0x10] sm:$0xff]
      %v602 = vld [vmem:[%s3 + $0x18] sm:$0xff]
      %v603 = vld [vmem:[%s3 + $0x20] sm:$0xff]
      %v604 = vld [vmem:[%s3 + $0x28] sm:$0xff]
      %v605 = vld [vmem:[%s3 + $0x30] sm:$0xff]
      %v606 = vld [vmem:[%s3 + $0x38] sm:$0xff]
      %608 = vset.pattern.permute.xlu0 0
      %609 = vperm.xlu0 %608, %v599
      %v610 = vpop.permute.xlu0 %609
      %613 = vset.pattern.permute.xlu0 0
      %614 = vperm.xlu0 %613, %v600
      %v615 = vpop.permute.xlu0 %614
      %618 = vset.pattern.permute.xlu0 0
      %619 = vperm.xlu0 %618, %v601
      %v620 = vpop.permute.xlu0 %619
      %623 = vset.pattern.permute.xlu0 0
      %624 = vperm.xlu0 %623, %v602
      %v625 = vpop.permute.xlu0 %624
      %628 = vset.pattern.permute.xlu0 0
      %629 = vperm.xlu0 %628, %v603
      %v630 = vpop.permute.xlu0 %629
      %633 = vset.pattern.permute.xlu0 0
      %634 = vperm.xlu0 %633, %v604
      %v635 = vpop.permute.xlu0 %634
      %638 = vset.pattern.permute.xlu0 0
      %639 = vperm.xlu0 %638, %v605
      %v640 = vpop.permute.xlu0 %639
      %643 = vset.pattern.permute.xlu0 0
      %644 = vperm.xlu0 %643, %v606
      %v645 = vpop.permute.xlu0 %644
      %v647 = vadd.f32 %v591, %v610
      %v648 = vadd.f32 %v592, %v615
      %v649 = vadd.f32 %v593, %v620
      %v650 = vadd.f32 %v594, %v625
      %v651 = vadd.f32 %v595, %v630
      %v652 = vadd.f32 %v596, %v635
      %v653 = vadd.f32 %v597, %v640
      %v654 = vadd.f32 %v598, %v645
      %v655 = vmax.f32 %v647, 0.0
      %v656 = vmax.f32 %v648, 0.0
      %v657 = vmax.f32 %v649, 0.0
      %v658 = vmax.f32 %v650, 0.0
      %v659 = vmax.f32 %v651, 0.0
      %v660 = vmax.f32 %v652, 0.0
      %v661 = vmax.f32 %v653, 0.0
      %v662 = vmax.f32 %v654, 0.0
      %v663 = vld [vmem:[%s4] sm:$0xf]
      %v664 = vld [vmem:[%s4 + $0x4] sm:$0xf]
      %v665 = vld [vmem:[%s4 + $0x8] sm:$0xf]
      %v666 = vld [vmem:[%s4 + $0xc] sm:$0xf]
      %v667 = vpack.c.bf16 %v656, %v655
      %v668 = vpack.c.bf16 %v658, %v657
      %v669 = vld [vmem:[%s5] sm:$0xff]
      %v670 = vld [vmem:[%s5 + $0x8] sm:$0xff]
      %v671 = vld [vmem:[%s5 + $0x10] sm:$0xff]
      %v672 = vld [vmem:[%s5 + $0x18] sm:$0xff]
      %674 = vset.pattern.permute.xlu0 0
      %675 = vperm.xlu0 %674, %v669
      %v676 = vpop.permute.xlu0 %675
      %679 = vset.pattern.permute.xlu0 0
      %680 = vperm.xlu0 %679, %v670
      %v681 = vpop.permute.xlu0 %680
      %684 = vset.pattern.permute.xlu0 0
      %685 = vperm.xlu0 %684, %v671
      %v686 = vpop.permute.xlu0 %685
      %689 = vset.pattern.permute.xlu0 0
      %690 = vperm.xlu0 %689, %v672
      %v691 = vpop.permute.xlu0 %690
      %v697 = vunpack.c.l.b16 %v663
      %v698 = vunpack.c.l.b16 %v664
      %v699 = vunpack.c.l.b16 %v665
      %v700 = vunpack.c.l.b16 %v666
      %v701 = vpack.c.b16 %v698, %v697
      %v702 = vpack.c.b16 %v700, %v699
      %vm703 = vcmask 261120
      %v705 = vsel %vm703, %v701, 0
      %v708 = vsel %vm703, %v702, 0
      %710 = vmatprep.subr.bf16.mxu0 0
      %711 = vmatpush1.bf16.msra.mxu0 %v667
      %712 = vmatprep.subr.bf16.mxu0 0
      %713 = vmatpush1.bf16.msra.mxu0 %v668
      %714 = vmatprep.subr.bf16.mxu0 0
      %715 = vmatpush1.bf16.msra.mxu0 0
      %716 = vmatprep.subr.bf16.mxu0 0
      %717 = vmatpush1.bf16.msra.mxu0 0
      %718 = vmatprep.subr.bf16.mxu0 0
      %719 = vmatpush1.bf16.msra.mxu0 0
      %720 = vmatprep.subr.bf16.mxu0 0
      %721 = vmatpush1.bf16.msra.mxu0 0
      %722 = vmatprep.subr.bf16.mxu0 0
      %723 = vmatpush1.bf16.msra.mxu0 0
      %724 = vmatprep.subr.bf16.mxu0 0
      %725 = vmatpush1.bf16.msra.mxu0 0
      %726 = vmatprep.subr.bf16.mxu0 0
      %727 = vmatpush1.bf16.msra.mxu0 0
      %728 = vmatprep.subr.bf16.mxu0 0
      %729 = vmatpush1.bf16.msra.mxu0 0
      %730 = vmatprep.subr.bf16.mxu0 0
      %731 = vmatpush1.bf16.msra.mxu0 0
      %732 = vmatprep.subr.bf16.mxu0 0
      %733 = vmatpush1.bf16.msra.mxu0 0
      %734 = vmatprep.subr.bf16.mxu0 0
      %735 = vmatpush1.bf16.msra.mxu0 0
      %736 = vmatprep.subr.bf16.mxu0 0
      %737 = vmatpush1.bf16.msra.mxu0 0
      %738 = vmatprep.subr.bf16.mxu0 0
      %739 = vmatpush1.bf16.msra.mxu0 0
      %740 = vmatprep.subr.bf16.mxu0 0
      %741 = vmatpush1.bf16.msra.mxu0 0
      %742 = vmatprep.mubr.bf16.mxu0 0
      %743 = vmatmul.mubr.bf16.gmra.mrb[0].mxu0 %v705
      %v744 = vpop.f32.mrb[0].mxu0
      %v745 = vadd.f32 %v676, %v744
      %v746 = vpop.f32.mrb[0].mxu0
      %v747 = vpop.f32.mrb[0].mxu0
      %v748 = vadd.f32 %v681, %v747
      %v749 = vpop.f32.mrb[0].mxu0
      %750 = vmatprep.mubr.bf16.mxu0 0
      %751 = vmatmul.mubr.bf16.gmra.mrb[0].mxu0 %v708
      %v752 = vpop.f32.mrb[0].mxu0
      %v753 = vadd.f32 %v686, %v752
      %v754 = vpop.f32.mrb[0].mxu0
      %v755 = vpop.f32.mrb[0].mxu0
      %v756 = vadd.f32 %v691, %v755
      %v757 = vpop.f32.mrb[0].mxu0
      %758 = vdwg.mxu0
      %v759 = vmax.f32 %v745, 0.0
      %v760 = vmax.f32 %v748, 0.0
      %v761 = vmax.f32 %v753, 0.0
      %v762 = vmax.f32 %v756, 0.0
      %v763 = vld [vmem:[%s6] sm:$0xf]
      %v764 = vld [vmem:[%s6 + $0x4] sm:$0xf]
      %v765 = vld [vmem:[%s6 + $0x8] sm:$0xf]
      %v766 = vld [vmem:[%s6 + $0xc] sm:$0xf]
      %v767 = vld [vmem:[%s6 + $0x10] sm:$0xf]
      %v768 = vld [vmem:[%s6 + $0x14] sm:$0xf]
      %v769 = vld [vmem:[%s6 + $0x18] sm:$0xf]
      %v770 = vld [vmem:[%s6 + $0x1c] sm:$0xf]
      %v771 = vld [vmem:[%s6 + $0x20] sm:$0xf]
      %v772 = vld [vmem:[%s6 + $0x24] sm:$0xf]
      %v773 = vld [vmem:[%s6 + $0x28] sm:$0xf]
      %v774 = vld [vmem:[%s6 + $0x2c] sm:$0xf]
      %v775 = vpack.c.bf16 %v760, %v759
      %v776 = vpack.c.bf16 %v762, %v761
      %v777 = vld [vmem:[%s7] sm:$0xf]
      %v778 = vld [vmem:[%s7 + $0x4] sm:$0xf]
      %v779 = vld [vmem:[%s7 + $0x8] sm:$0xf]
      %v780 = vld [vmem:[%s7 + $0xc] sm:$0xf]
      %v781 = vld [vmem:[%s7 + $0x10] sm:$0xf]
      %v782 = vld [vmem:[%s7 + $0x14] sm:$0xf]
      %v783 = vld [vmem:[%s7 + $0x18] sm:$0xf]
      %v784 = vld [vmem:[%s7 + $0x1c] sm:$0xf]
      %v785 = vld [vmem:[%s7 + $0x20] sm:$0xf]
      %v786 = vld [vmem:[%s7 + $0x24] sm:$0xf]
      %v787 = vld [vmem:[%s7 + $0x28] sm:$0xf]
      %v788 = vld [vmem:[%s7 + $0x2c] sm:$0xf]
      %v789 = vpack.c.bf16 %v660, %v659
      %v790 = vpack.c.bf16 %v662, %v661
      %v803 = vunpack.c.l.b16 %v777
      %v804 = vunpack.c.l.b16 %v778
      %v805 = vunpack.c.l.b16 %v779
      %v806 = vunpack.c.l.b16 %v780
      %v807 = vunpack.c.l.b16 %v781
      %v808 = vunpack.c.l.b16 %v782
      %v809 = vunpack.c.l.b16 %v783
      %v810 = vunpack.c.l.b16 %v784
      %v811 = vunpack.c.l.b16 %v785
      %v812 = vunpack.c.l.b16 %v786
      %v813 = vunpack.c.l.b16 %v787
      %v814 = vunpack.c.l.b16 %v788
      %v815 = vpack.c.b16 %v804, %v803
      %v816 = vpack.c.b16 %v806, %v805
      %v817 = vpack.c.b16 %v808, %v807
      %v818 = vpack.c.b16 %v810, %v809
      %v819 = vpack.c.b16 %v812, %v811
      %v820 = vpack.c.b16 %v814, %v813
      %v822 = vsel %vm703, %v815, 0
      %v825 = vsel %vm703, %v816, 0
      %v828 = vsel %vm703, %v817, 0
      %v831 = vsel %vm703, %v818, 0
      %v834 = vsel %vm703, %v819, 0
      %v837 = vsel %vm703, %v820, 0
      %839 = vmatprep.subr.bf16.mxu0 0
      %840 = vmatpush1.bf16.msra.mxu0 %v789
      %841 = vmatprep.subr.bf16.mxu0 0
      %842 = vmatpush1.bf16.msra.mxu0 %v790
      %843 = vmatprep.subr.bf16.mxu0 0
      %844 = vmatpush1.bf16.msra.mxu0 0
      %845 = vmatprep.subr.bf16.mxu0 0
      %846 = vmatpush1.bf16.msra.mxu0 0
      %847 = vmatprep.subr.bf16.mxu0 0
      %848 = vmatpush1.bf16.msra.mxu0 0
      %849 = vmatprep.subr.bf16.mxu0 0
      %850 = vmatpush1.bf16.msra.mxu0 0
      %851 = vmatprep.subr.bf16.mxu0 0
      %852 = vmatpush1.bf16.msra.mxu0 0
      %853 = vmatprep.subr.bf16.mxu0 0
      %854 = vmatpush1.bf16.msra.mxu0 0
      %855 = vmatprep.subr.bf16.mxu0 0
      %856 = vmatpush1.bf16.msra.mxu0 0
      %857 = vmatprep.subr.bf16.mxu0 0
      %858 = vmatpush1.bf16.msra.mxu0 0
      %859 = vmatprep.subr.bf16.mxu0 0
      %860 = vmatpush1.bf16.msra.mxu0 0
      %861 = vmatprep.subr.bf16.mxu0 0
      %862 = vmatpush1.bf16.msra.mxu0 0
      %863 = vmatprep.subr.bf16.mxu0 0
      %864 = vmatpush1.bf16.msra.mxu0 0
      %865 = vmatprep.subr.bf16.mxu0 0
      %866 = vmatpush1.bf16.msra.mxu0 0
      %867 = vmatprep.subr.bf16.mxu0 0
      %868 = vmatpush1.bf16.msra.mxu0 0
      %869 = vmatprep.subr.bf16.mxu0 0
      %870 = vmatpush1.bf16.msra.mxu0 0
      %871 = vmatprep.mubr.bf16.mxu0 0
      %872 = vmatmul.mubr.bf16.gmra.mrb[0].mxu0 %v822
      %v873 = vpop.f32.mrb[0].mxu0
      %v874 = vadd.f32 0.0, %v873
      %v875 = vpop.f32.mrb[0].mxu0
      %v876 = vpop.f32.mrb[0].mxu0
      %v877 = vadd.f32 0.0, %v876
      %v878 = vpop.f32.mrb[0].mxu0
      %879 = vmatprep.mubr.bf16.mxu0 0
      %880 = vmatmul.mubr.bf16.gmra.mrb[0].mxu0 %v825
      %v881 = vpop.f32.mrb[0].mxu0
      %v882 = vadd.f32 0.0, %v881
      %v883 = vpop.f32.mrb[0].mxu0
      %v884 = vpop.f32.mrb[0].mxu0
      %v885 = vadd.f32 0.0, %v884
      %v886 = vpop.f32.mrb[0].mxu0
      %887 = vmatprep.mubr.bf16.mxu0 0
      %888 = vmatmul.mubr.bf16.gmra.mrb[0].mxu0 %v828
      %v889 = vpop.f32.mrb[0].mxu0
      %v890 = vadd.f32 0.0, %v889
      %v891 = vpop.f32.mrb[0].mxu0
      %v892 = vpop.f32.mrb[0].mxu0
      %v893 = vadd.f32 0.0, %v892
      %v894 = vpop.f32.mrb[0].mxu0
      %895 = vmatprep.mubr.bf16.mxu0 0
      %896 = vmatmul.mubr.bf16.gmra.mrb[0].mxu0 %v831
      %v897 = vpop.f32.mrb[0].mxu0
      %v898 = vadd.f32 0.0, %v897
      %v899 = vpop.f32.mrb[0].mxu0
      %v900 = vpop.f32.mrb[0].mxu0
      %v901 = vadd.f32 0.0, %v900
      %v902 = vpop.f32.mrb[0].mxu0
      %903 = vmatprep.mubr.bf16.mxu0 0
      %904 = vmatmul.mubr.bf16.gmra.mrb[0].mxu0 %v834
      %v905 = vpop.f32.mrb[0].mxu0
      %v906 = vadd.f32 0.0, %v905
      %v907 = vpop.f32.mrb[0].mxu0
      %v908 = vpop.f32.mrb[0].mxu0
      %v909 = vadd.f32 0.0, %v908
      %v910 = vpop.f32.mrb[0].mxu0
      %911 = vmatprep.mubr.bf16.mxu0 0
      %912 = vmatmul.mubr.bf16.gmra.mrb[0].mxu0 %v837
      %v913 = vpop.f32.mrb[0].mxu0
      %v914 = vadd.f32 0.0, %v913
      %v915 = vpop.f32.mrb[0].mxu0
      %v916 = vpop.f32.mrb[0].mxu0
      %v917 = vadd.f32 0.0, %v916
      %v918 = vpop.f32.mrb[0].mxu0
      %919 = vdwg.mxu0
      %v932 = vunpack.c.l.b16 %v763
      %v933 = vunpack.c.l.b16 %v764
      %v934 = vunpack.c.l.b16 %v765
      %v935 = vunpack.c.l.b16 %v766
      %v936 = vunpack.c.l.b16 %v767
      %v937 = vunpack.c.l.b16 %v768
      %v938 = vunpack.c.l.b16 %v769
      %v939 = vunpack.c.l.b16 %v770
      %v940 = vunpack.c.l.b16 %v771
      %v941 = vunpack.c.l.b16 %v772
      %v942 = vunpack.c.l.b16 %v773
      %v943 = vunpack.c.l.b16 %v774
      %v944 = vpack.c.b16 %v933, %v932
      %v945 = vpack.c.b16 %v935, %v934
      %v946 = vpack.c.b16 %v937, %v936
      %v947 = vpack.c.b16 %v939, %v938
      %v948 = vpack.c.b16 %v941, %v940
      %v949 = vpack.c.b16 %v943, %v942
      %v951 = vsel %vm703, %v944, 0
      %v954 = vsel %vm703, %v945, 0
      %v957 = vsel %vm703, %v946, 0
      %v960 = vsel %vm703, %v947, 0
      %v963 = vsel %vm703, %v948, 0
      %v966 = vsel %vm703, %v949, 0
      %968 = vmatprep.subr.bf16.mxu0 0
      %969 = vmatpush1.bf16.msra.mxu0 %v775
      %970 = vmatprep.subr.bf16.mxu0 0
      %971 = vmatpush1.bf16.msra.mxu0 %v776
      %972 = vmatprep.subr.bf16.mxu0 0
      %973 = vmatpush1.bf16.msra.mxu0 0
      %974 = vmatprep.subr.bf16.mxu0 0
      %975 = vmatpush1.bf16.msra.mxu0 0
      %976 = vmatprep.subr.bf16.mxu0 0
      %977 = vmatpush1.bf16.msra.mxu0 0
      %978 = vmatprep.subr.bf16.mxu0 0
      %979 = vmatpush1.bf16.msra.mxu0 0
      %980 = vmatprep.subr.bf16.mxu0 0
      %981 = vmatpush1.bf16.msra.mxu0 0
      %982 = vmatprep.subr.bf16.mxu0 0
      %983 = vmatpush1.bf16.msra.mxu0 0
      %984 = vmatprep.subr.bf16.mxu0 0
      %985 = vmatpush1.bf16.msra.mxu0 0
      %986 = vmatprep.subr.bf16.mxu0 0
      %987 = vmatpush1.bf16.msra.mxu0 0
      %988 = vmatprep.subr.bf16.mxu0 0
      %989 = vmatpush1.bf16.msra.mxu0 0
      %990 = vmatprep.subr.bf16.mxu0 0
      %991 = vmatpush1.bf16.msra.mxu0 0
      %992 = vmatprep.subr.bf16.mxu0 0
      %993 = vmatpush1.bf16.msra.mxu0 0
      %994 = vmatprep.subr.bf16.mxu0 0
      %995 = vmatpush1.bf16.msra.mxu0 0
      %996 = vmatprep.subr.bf16.mxu0 0
      %997 = vmatpush1.bf16.msra.mxu0 0
      %998 = vmatprep.subr.bf16.mxu0 0
      %999 = vmatpush1.bf16.msra.mxu0 0
      %1000 = vmatprep.mubr.bf16.mxu0 0
      %1001 = vmatmul.mubr.bf16.gmra.mrb[0].mxu0 %v951
      %v1002 = vpop.f32.mrb[0].mxu0
      %v1003 = vadd.f32 %v874, %v1002
      %v1004 = vpop.f32.mrb[0].mxu0
      %v1005 = vpop.f32.mrb[0].mxu0
      %v1006 = vadd.f32 %v877, %v1005
      %v1007 = vpop.f32.mrb[0].mxu0
      %1008 = vmatprep.mubr.bf16.mxu0 0
      %1009 = vmatmul.mubr.bf16.gmra.mrb[0].mxu0 %v954
      %v1010 = vpop.f32.mrb[0].mxu0
      %v1011 = vadd.f32 %v882, %v1010
      %v1012 = vpop.f32.mrb[0].mxu0
      %v1013 = vpop.f32.mrb[0].mxu0
      %v1014 = vadd.f32 %v885, %v1013
      %v1015 = vpop.f32.mrb[0].mxu0
      %1016 = vmatprep.mubr.bf16.mxu0 0
      %1017 = vmatmul.mubr.bf16.gmra.mrb[0].mxu0 %v957
      %v1018 = vpop.f32.mrb[0].mxu0
      %v1019 = vadd.f32 %v890, %v1018
      %v1020 = vpop.f32.mrb[0].mxu0
      %v1021 = vpop.f32.mrb[0].mxu0
      %v1022 = vadd.f32 %v893, %v1021
      %v1023 = vpop.f32.mrb[0].mxu0
      %1024 = vmatprep.mubr.bf16.mxu0 0
      %1025 = vmatmul.mubr.bf16.gmra.mrb[0].mxu0 %v960
      %v1026 = vpop.f32.mrb[0].mxu0
      %v1027 = vadd.f32 %v898, %v1026
      %v1028 = vpop.f32.mrb[0].mxu0
      %v1029 = vpop.f32.mrb[0].mxu0
      %v1030 = vadd.f32 %v901, %v1029
      %v1031 = vpop.f32.mrb[0].mxu0
      %1032 = vmatprep.mubr.bf16.mxu0 0
      %1033 = vmatmul.mubr.bf16.gmra.mrb[0].mxu0 %v963
      %v1034 = vpop.f32.mrb[0].mxu0
      %v1035 = vadd.f32 %v906, %v1034
      %v1036 = vpop.f32.mrb[0].mxu0
      %v1037 = vpop.f32.mrb[0].mxu0
      %v1038 = vadd.f32 %v909, %v1037
      %v1039 = vpop.f32.mrb[0].mxu0
      %1040 = vmatprep.mubr.bf16.mxu0 0
      %1041 = vmatmul.mubr.bf16.gmra.mrb[0].mxu0 %v966
      %v1042 = vpop.f32.mrb[0].mxu0
      %v1043 = vadd.f32 %v914, %v1042
      %v1044 = vpop.f32.mrb[0].mxu0
      %v1045 = vpop.f32.mrb[0].mxu0
      %v1046 = vadd.f32 %v917, %v1045
      %v1047 = vpop.f32.mrb[0].mxu0
      %1048 = vdwg.mxu0
      %v1049 = vld [vmem:[%s8] sm:$0xff]
      %v1050 = vld [vmem:[%s8 + $0x8] sm:$0xff]
      %v1051 = vld [vmem:[%s8 + $0x10] sm:$0xff]
      %v1052 = vld [vmem:[%s8 + $0x18] sm:$0xff]
      %v1053 = vld [vmem:[%s8 + $0x20] sm:$0xff]
      %v1054 = vld [vmem:[%s8 + $0x28] sm:$0xff]
      %v1055 = vld [vmem:[%s8 + $0x30] sm:$0xff]
      %v1056 = vld [vmem:[%s8 + $0x38] sm:$0xff]
      %v1057 = vld [vmem:[%s8 + $0x40] sm:$0xff]
      %v1058 = vld [vmem:[%s8 + $0x48] sm:$0xff]
      %v1059 = vld [vmem:[%s8 + $0x50] sm:$0xff]
      %v1060 = vld [vmem:[%s8 + $0x58] sm:$0xff]
      %1062 = vset.pattern.permute.xlu0 0
      %1063 = vperm.xlu0 %1062, %v1049
      %v1064 = vpop.permute.xlu0 %1063
      %1067 = vset.pattern.permute.xlu0 0
      %1068 = vperm.xlu0 %1067, %v1050
      %v1069 = vpop.permute.xlu0 %1068
      %1072 = vset.pattern.permute.xlu0 0
      %1073 = vperm.xlu0 %1072, %v1051
      %v1074 = vpop.permute.xlu0 %1073
      %1077 = vset.pattern.permute.xlu0 0
      %1078 = vperm.xlu0 %1077, %v1052
      %v1079 = vpop.permute.xlu0 %1078
      %1082 = vset.pattern.permute.xlu0 0
      %1083 = vperm.xlu0 %1082, %v1053
      %v1084 = vpop.permute.xlu0 %1083
      %1087 = vset.pattern.permute.xlu0 0
      %1088 = vperm.xlu0 %1087, %v1054
      %v1089 = vpop.permute.xlu0 %1088
      %1092 = vset.pattern.permute.xlu0 0
      %1093 = vperm.xlu0 %1092, %v1055
      %v1094 = vpop.permute.xlu0 %1093
      %1097 = vset.pattern.permute.xlu0 0
      %1098 = vperm.xlu0 %1097, %v1056
      %v1099 = vpop.permute.xlu0 %1098
      %1102 = vset.pattern.permute.xlu0 0
      %1103 = vperm.xlu0 %1102, %v1057
      %v1104 = vpop.permute.xlu0 %1103
      %1107 = vset.pattern.permute.xlu0 0
      %1108 = vperm.xlu0 %1107, %v1058
      %v1109 = vpop.permute.xlu0 %1108
      %1112 = vset.pattern.permute.xlu0 0
      %1113 = vperm.xlu0 %1112, %v1059
      %v1114 = vpop.permute.xlu0 %1113
      %1117 = vset.pattern.permute.xlu0 0
      %1118 = vperm.xlu0 %1117, %v1060
      %v1119 = vpop.permute.xlu0 %1118
      %v1121 = vadd.f32 %v1003, %v1064
      %v1122 = vadd.f32 %v1006, %v1069
      %v1123 = vadd.f32 %v1011, %v1074
      %v1124 = vadd.f32 %v1014, %v1079
      %v1125 = vadd.f32 %v1019, %v1084
      %v1126 = vadd.f32 %v1022, %v1089
      %v1127 = vadd.f32 %v1027, %v1094
      %v1128 = vadd.f32 %v1030, %v1099
      %v1129 = vadd.f32 %v1035, %v1104
      %v1130 = vadd.f32 %v1038, %v1109
      %v1131 = vadd.f32 %v1043, %v1114
      %v1132 = vadd.f32 %v1046, %v1119
      %v1133 = vpack.c.bf16 %v1122, %v1121
      %v1134 = vpack.c.bf16 %v1124, %v1123
      %v1135 = vpack.c.bf16 %v1126, %v1125
      %v1136 = vpack.c.bf16 %v1128, %v1127
      %v1137 = vpack.c.bf16 %v1130, %v1129
      %v1138 = vpack.c.bf16 %v1132, %v1131
      %v1145 = vunpack.c.l.b16 %v1133
      %v1146 = vunpack.c.h.b16 %v1133
      %v1147 = vunpack.c.l.b16 %v1134
      %v1148 = vunpack.c.h.b16 %v1134
      %v1149 = vunpack.c.l.b16 %v1135
      %v1150 = vunpack.c.h.b16 %v1135
      %v1151 = vunpack.c.l.b16 %v1136
      %v1152 = vunpack.c.h.b16 %v1136
      %v1153 = vunpack.c.l.b16 %v1137
      %v1154 = vunpack.c.h.b16 %v1137
      %v1155 = vunpack.c.l.b16 %v1138
      %v1156 = vunpack.c.h.b16 %v1138
      %v1157 = vpack.c.b16 %v1145, %v1145
      %v1158 = vpack.c.b16 %v1146, %v1146
      %v1159 = vpack.c.b16 %v1147, %v1147
      %v1160 = vpack.c.b16 %v1148, %v1148
      %v1161 = vpack.c.b16 %v1149, %v1149
      %v1162 = vpack.c.b16 %v1150, %v1150
      %v1163 = vpack.c.b16 %v1151, %v1151
      %v1164 = vpack.c.b16 %v1152, %v1152
      %v1165 = vpack.c.b16 %v1153, %v1153
      %v1166 = vpack.c.b16 %v1154, %v1154
      %v1167 = vpack.c.b16 %v1155, %v1155
      %v1168 = vpack.c.b16 %v1156, %v1156
      %vm1181 = vcmask 519168
      %1182 = vst.msk [vmem:[%s360] sm:$0xf] %vm1181, %v1157
      %1183 = vst.msk [vmem:[%s360 + $0x4] sm:$0xf] %vm1181, %v1158
      %1184 = vst.msk [vmem:[%s360 + $0x8] sm:$0xf] %vm1181, %v1159
      %1185 = vst.msk [vmem:[%s360 + $0xc] sm:$0xf] %vm1181, %v1160
      %1186 = vst.msk [vmem:[%s360 + $0x10] sm:$0xf] %vm1181, %v1161
      %1187 = vst.msk [vmem:[%s360 + $0x14] sm:$0xf] %vm1181, %v1162
      %1188 = vst.msk [vmem:[%s360 + $0x18] sm:$0xf] %vm1181, %v1163
      %1189 = vst.msk [vmem:[%s360 + $0x1c] sm:$0xf] %vm1181, %v1164
      %1190 = vst.msk [vmem:[%s360 + $0x20] sm:$0xf] %vm1181, %v1165
      %1191 = vst.msk [vmem:[%s360 + $0x24] sm:$0xf] %vm1181, %v1166
      %1192 = vst.msk [vmem:[%s360 + $0x28] sm:$0xf] %vm1181, %v1167
      %1193 = vst.msk [vmem:[%s360 + $0x2c] sm:$0xf] %vm1181, %v1168
      %p1194 = scmp.lt.s32.totalorder %s24, 1
      %s1195 = scalar_select %p1194, %s24, 1
      %p1196 = scmp.lt.s32.totalorder %s25, 0
      %s1197 = scalar_select %p1196, %s25, 0
      %s1198 = smul.addr %s1195, 12
      %s1199 = sadd.s32 %s1197, %s1198
      %s1200 = smul.addr %s1199, 4
      %s1201 = scalar_lea.vmem %s9, %s1200
      // Predicated region
      $region57: #{img2plane_forward.1} parent=55 // pred_check
        %p1202 = pneg %p248
      $region58: #{img2plane_forward.1} parent=55 // pred_check_branch
        %1204 = sbr.rel (%p1202) target = $region60
      $region59: #{img2plane_forward.1} parent=55 // pred_region
        _
      $region60: #{img2plane_forward.1} parent=55 // pred_fallthru
        _
    $region56: #{img2plane_forward.1} parent=5 // pred_fallthru
      _
    %p1205 = scmp.le.s32.totalorder 2, %s15
    // Predicated region
    $region61: #{img2plane_forward.1} parent=5 // pred_check
      %p1206 = pneg %p1205
    $region62: #{img2plane_forward.1} parent=5 // pred_check_branch
      %1208 = sbr.rel (%p1206) target = $region64
    $region63: #{img2plane_forward.1} parent=5 // pred_region
      %s1209 = ssub.s32 %s15, 2
      // Predicated region
      $region65: #{img2plane_forward.1} parent=63 // pred_check
        %p1210 = pneg %p254
      $region66: #{img2plane_forward.1} parent=63 // pred_check_branch
        %1212 = sbr.rel (%p1210) target = $region68
      $region67: #{img2plane_forward.1} parent=63 // pred_region
        %p1213 = scmp.lt.s32.totalorder %s26, 1
        %s1214 = scalar_select %p1213, %s26, 1
        %p1215 = scmp.lt.s32.totalorder %s27, 0
        %s1216 = scalar_select %p1215, %s27, 0
        %s1217 = smul.addr %s1214, 12
        %s1218 = sadd.s32 %s1216, %s1217
        %s1219 = smul.addr %s1218, 4
        %s1220 = scalar_lea.vmem %s9, %s1219
      $region68: #{img2plane_forward.1} parent=63 // pred_fallthru
        _
    $region64: #{img2plane_forward.1} parent=5 // pred_fallthru
      _
  $region6: #{img2plane_forward.1} parent=0 // loop_footer
    %s19 = sadd.s32 1, %s15
  $region7: #{img2plane_forward.1} parent=0 // loop_footer_branch
    %14 = sbr.rel target = $region3
  $region8: #{img2plane_forward.1} parent=0 // loop_exit
    _

</llo_original>
